<compile_context>
chip_gen: v7x
topology: tpu7x:2x2x1
jax: 0.10.0
libtpu: 0.0.40
codegen_flags: <defaults>
</compile_context>

<pallas_src>
import jax
import jax.numpy as jnp
from jax.experimental import pallas as pl
from jax.experimental.pallas import tpu as pltpu

# ---- model sizes ---------------------------------------------------------------
N_FEATURES = 64       # encoder input / decoder output width
HIDDEN = 32           # MLP hidden width
D_INT = 6             # intrinsic latent dim  (2 + 2 + 2)
D_AMB = 8             # ambient latent dim    (3 + 2 + 3)
HEAD_W = 16           # stacked head rows: [u_mean ambient (8) | logvar (6) | pad (2)]

# ---- transposed packed layouts ---------------------------------------------------
IN_ROWS = 128                       # input slab rows: [x^T (64) | eps^T (6) | ones | 0]
ONES_ROW = N_FEATURES + D_INT       # = 70, constant-1 row (folds encoder-1 bias)
H1A = 40                            # hidden rows: [h (32) | ones (1) | pad (7)]
Z_AUG = 16                          # decoder-in rows: [z ambient (8) | ones (1) | pad (7)]
OUT_ROWS = 80                       # output slab rows: [x_rec (64) | z_mean (8) | var (6) | pad]
W1A_OFF = 0                         # weight slab band offsets
WHB_OFF = W1A_OFF + H1A             # 40
WD1A_OFF = WHB_OFF + HEAD_W         # 56
WD2A_OFF = WD1A_OFF + H1A           # 96
W_ROWS = WD2A_OFF + N_FEATURES      # 160
W_LANES = 128


def _round_up(n, m):
    return ((n + m - 1) // m) * m


# ---- numeric helpers (used both in-kernel and in the pure-JAX reference) --------
def _cosh_sinh_ratio(n):
    """(cosh(n), sinh(n)/n) sharing one exp pair; series branch for small n."""
    e = jnp.exp(n)
    ie = jnp.exp(-n)
    cosh = 0.5 * (e + ie)
    sinh = 0.5 * (e - ie)
    ratio = jnp.where(n < 1e-2, 1.0 + (n * n) * (1.0 / 6.0),
                      sinh / jnp.maximum(n, 1e-12))
    return cosh, ratio


def _cos_sin_ratio(n):
    """(cos(n), sin(n)/n); series branch for small n."""
    c = jnp.cos(n)
    s = jnp.sin(n)
    ratio = jnp.where(n < 1e-2, 1.0 - (n * n) * (1.0 / 6.0),
                      s / jnp.maximum(n, 1e-12))
    return c, ratio


# ---- the fused forward kernel (transposed layout: rows=features, lanes=batch) ----
def vae_fwd_kernel(xin_ref, w_ref, out_ref):
    f32 = jnp.float32
    xin = xin_ref[...]                                       # (IN_ROWS, TM)
    tm = xin.shape[1]

    # weight bands (static slices of the VMEM-resident slab)
    w1a = w_ref[W1A_OFF:W1A_OFF + H1A, :]                    # (40, 128) enc-1 (+b1, +ones row)
    whb = w_ref[WHB_OFF:WHB_OFF + HEAD_W, 0:H1A]             # (16, 40)  stacked heads (+bias col)
    wd1a = w_ref[WD1A_OFF:WD1A_OFF + H1A, 0:Z_AUG]           # (40, 16)  dec-1 (+bd1, +ones row)
    wd2a = w_ref[WD2A_OFF:WD2A_OFF + N_FEATURES, 0:H1A]      # (64, 40)  dec-2 (+bd2 col)

    # ---- encoder (biases folded via the constant-1 rows) ----
    h_aug = jnp.maximum(jnp.dot(w1a, xin, preferred_element_type=f32), 0.0)   # (40, TM)
    head = jnp.dot(whb, h_aug, preferred_element_type=f32)                    # (16, TM)
    # rows 0:8  -> u_mean ambient tangent at origin (projection folded into weights)
    # rows 8:14 -> z_logvar (intrinsic)

    logvar = head[D_AMB:D_AMB + D_INT, :]                    # (6, TM)
    var = jnp.exp(logvar) + 1e-8                             # exp(logvar) + 1e-8
    eps = xin[N_FEATURES:N_FEATURES + D_INT, :]              # (6, TM)
    v = eps * jnp.sqrt(var)                                  # intrinsic tangent sample

    # ---- hyperbolic factor H^2 (Lorentz, K = -1): ambient rows 0..2 ----
    # TODO(synk): cosh overflows f32 for ||u_mean|| >~ 88, matching torch.cosh in f32.
    uh1, uh2 = head[1:2, :], head[2:3, :]
    vh1, vh2 = v[0:1, :], v[1:2, :]
    nh = jnp.sqrt(uh1 * uh1 + uh2 * uh2)
    mu_h0, rh = _cosh_sinh_ratio(nh)                         # expmap at the origin
    mh1, mh2 = rh * uh1, rh * uh2
    inner = mh1 * vh1 + mh2 * vh2                            # <mu, v>_L (v time comp = 0)
    coef = inner / (1.0 + mu_h0)                             # parallel transport mu0 -> mu
    pt0 = coef * (mu_h0 + 1.0)
    pt1 = vh1 + coef * mh1
    pt2 = vh2 + coef * mh2
    nn = jnp.sqrt(jnp.maximum(pt1 * pt1 + pt2 * pt2 - pt0 * pt0, 0.0))
    c2, r2 = _cosh_sinh_ratio(nn)                            # expmap at mu
    zh0 = c2 * mu_h0 + r2 * pt0
    zh1 = c2 * mh1 + r2 * pt1
    zh2 = c2 * mh2 + r2 * pt2

    # ---- Euclidean factor E^2: ambient rows 3..4 ----
    mu_e = head[3:5, :]
    z_e = mu_e + v[2:4, :]

    # ---- spherical factor S^2 (K = +1): ambient rows 5..7 ----
    us1, us2 = head[6:7, :], head[7:8, :]
    vs1, vs2 = v[4:5, :], v[5:6, :]
    ns = jnp.sqrt(us1 * us1 + us2 * us2)
    mu_s0, rs = _cos_sin_ratio(ns)
    ms1, ms2 = rs * us1, rs * us2
    inner_s = ms1 * vs1 + ms2 * vs2
    coef_s = -inner_s / (1.0 + mu_s0)
    pt0_s = coef_s * (mu_s0 + 1.0)
    ps1 = vs1 + coef_s * ms1
    ps2 = vs2 + coef_s * ms2
    nns = jnp.sqrt(pt0_s * pt0_s + ps1 * ps1 + ps2 * ps2)
    cc, rr = _cos_sin_ratio(nns)
    zs0 = cc * mu_s0 + rr * pt0_s
    zs1 = cc * ms1 + rr * ps1
    zs2 = cc * ms2 + rr * ps2

    # assemble z (augmented with a ones row -> decoder bias folding) and z_mean
    ones = jnp.ones((1, tm), f32)
    z_aug = jnp.concatenate(
        [zh0, zh1, zh2, z_e, zs0, zs1, zs2, ones,
         jnp.zeros((Z_AUG - D_AMB - 1, tm), f32)], axis=0)   # (16, TM)
    zmean = jnp.concatenate([mu_h0, mh1, mh2, mu_e, mu_s0, ms1, ms2], axis=0)  # (8, TM)

    # ---- decoder ----
    hd_aug = jnp.maximum(jnp.dot(wd1a, z_aug, preferred_element_type=f32), 0.0)  # (40, TM)
    x_rec = jnp.dot(wd2a, hd_aug, preferred_element_type=f32)                    # (64, TM)

    # lane-dense, sublane-aligned stores
    out_ref[0:N_FEATURES, :] = x_rec
    out_ref[N_FEATURES:N_FEATURES + D_AMB, :] = zmean
    out_ref[N_FEATURES + D_AMB:OUT_ROWS, :] = jnp.concatenate(
        [var, jnp.zeros((OUT_ROWS - N_FEATURES - D_AMB - D_INT, tm), f32)], axis=0)


# ---- wrapper ---------------------------------------------------------------------
def product_space_vae_forward(x, eps, w_packed, *, tm=None):
    """Returns (x_reconstructed, z_means, sigmas) like the PyTorch module."""
    bsz, feat = x.shape
    assert feat == N_FEATURES and eps.shape == (bsz, D_INT)
    assert w_packed.shape == (W_ROWS, W_LANES)

    pb8 = _round_up(bsz, 8)
    if tm is None:
        tm = 128 if pb8 > 128 else pb8          # lane-dense tiles; whole batch if small
    padded_b = _round_up(bsz, tm)
    grid = (padded_b // tm,)

    # one packed, transposed input slab (a single DMA per batch tile)
    xin = jnp.zeros((IN_ROWS, padded_b), jnp.float32)
    xin = xin.at[0:N_FEATURES, 0:bsz].set(x.T.astype(jnp.float32))
    xin = xin.at[N_FEATURES:N_FEATURES + D_INT, 0:bsz].set(eps.T.astype(jnp.float32))
    xin = xin.at[ONES_ROW, :].set(1.0)

    flops = 2 * padded_b * (IN_ROWS * H1A + H1A * HEAD_W + Z_AUG * H1A + H1A * N_FEATURES)
    bytes_accessed = 4 * (IN_ROWS * padded_b + W_ROWS * W_LANES + OUT_ROWS * padded_b)

    out = pl.pallas_call(
        vae_fwd_kernel,
        out_shape=jax.ShapeDtypeStruct((OUT_ROWS, padded_b), jnp.float32),
        grid=grid,
        in_specs=[
            pl.BlockSpec((IN_ROWS, tm), lambda i: (0, i)),      # batch-tiled activations
            pl.BlockSpec((W_ROWS, W_LANES), lambda i: (0, 0)),  # weights stay VMEM-resident
        ],
        out_specs=pl.BlockSpec((OUT_ROWS, tm), lambda i: (0, i)),
        compiler_params=pltpu.CompilerParams(
            dimension_semantics=("parallel",)),                 # shard batch tiles over TCs
        cost_estimate=pl.CostEstimate(
            flops=flops, transcendentals=32 * padded_b, bytes_accessed=bytes_accessed),
    )(xin, w_packed)

    x_rec = out[0:N_FEATURES, 0:bsz].T
    z_mean = out[N_FEATURES:N_FEATURES + D_AMB, 0:bsz].T
    var = out[N_FEATURES + D_AMB:N_FEATURES + D_AMB + D_INT, 0:bsz].T

    # glue: sigmas = [diag_embed(exp(logvar_i) + 1e-8)] per factor (intrinsic 2,2,2)
    eye2 = jnp.eye(2, dtype=var.dtype)
    sigmas = [var[:, 0:2, None] * eye2[None],
              var[:, 2:4, None] * eye2[None],
              var[:, 4:6, None] * eye2[None]]
    return x_rec, z_mean, sigmas


# ---- deterministic parameter construction + one-time packing ----------------------
def _build_params(key):
    ks = jax.random.split(key, 8)

    def init(k, shape, scale=0.1):
        return (scale * jax.random.normal(k, shape, jnp.float32)).astype(jnp.float32)

    w1 = init(ks[0], (N_FEATURES, HIDDEN))
    b1 = jnp.zeros((1, HIDDEN), jnp.float32)
    wmu = init(ks[1], (HIDDEN, D_INT))
    bmu = jnp.zeros((1, D_INT), jnp.float32)
    wlv = init(ks[2], (HIDDEN, D_INT))
    blv = jnp.zeros((1, D_INT), jnp.float32)

    # projection_matrix: intrinsic -> ambient, zero "time" coords for H and S
    amb_cols = jnp.array([1, 2, 3, 4, 6, 7], dtype=jnp.int32)
    proj = jnp.zeros((D_INT, D_AMB), jnp.float32).at[jnp.arange(D_INT), amb_cols].set(1.0)

    wd1 = init(ks[3], (D_AMB, HIDDEN))
    bd1 = jnp.zeros((1, HIDDEN), jnp.float32)
    wd2 = init(ks[4], (HIDDEN, N_FEATURES))
    bd2 = jnp.zeros((1, N_FEATURES), jnp.float32)

    return (w1, b1, wmu, bmu, wlv, blv, proj, wd1, bd1, wd2, bd2)


def pack_params(raw):
    """One-time parameter prep: transpose all weights into feature-major bands of a
    single (160, 128) slab, fold the tangent->ambient projection into the mean head,
    and fold every bias via constant-1 rows (input slab row 70, hidden-ones rows)."""
    (w1, b1, wmu, bmu, wlv, blv, proj, wd1, bd1, wd2, bd2) = raw

    # kernel assumes the canonical 0/1 time-padding projection (routes sampled tangent)
    expected_proj = jnp.zeros((D_INT, D_AMB), jnp.float32).at[
        jnp.arange(D_INT), jnp.array([1, 2, 3, 4, 6, 7])].set(1.0)
    assert bool(jnp.all(proj == expected_proj)), \
        "kernel assumes the canonical time-padding projection_matrix"

    w = jnp.zeros((W_ROWS, W_LANES), jnp.float32)

    # band A: encoder layer-1 (augmented) -> rows 0:40, lanes 0:128
    w = w.at[W1A_OFF:W1A_OFF + HIDDEN, 0:N_FEATURES].set(w1.T)     # (32, 64)
    w = w.at[W1A_OFF:W1A_OFF + HIDDEN, ONES_ROW].set(b1[0])        # b1 folded
    w = w.at[W1A_OFF + HIDDEN, ONES_ROW].set(1.0)                  # ones-producer row

    # band B: stacked mean/logvar heads -> rows 40:56, lanes 0:40
    w = w.at[WHB_OFF:WHB_OFF + D_AMB, 0:HIDDEN].set((wmu @ proj).T)            # (8, 32)
    w = w.at[WHB_OFF + D_AMB:WHB_OFF + D_AMB + D_INT, 0:HIDDEN].set(wlv.T)     # (6, 32)
    w = w.at[WHB_OFF:WHB_OFF + D_AMB, HIDDEN].set((bmu @ proj)[0])
    w = w.at[WHB_OFF + D_AMB:WHB_OFF + D_AMB + D_INT, HIDDEN].set(blv[0])

    # band C: decoder layer-1 (augmented) -> rows 56:96, lanes 0:16
    w = w.at[WD1A_OFF:WD1A_OFF + HIDDEN, 0:D_AMB].set(wd1.T)       # (32, 8)
    w = w.at[WD1A_OFF:WD1A_OFF + HIDDEN, D_AMB].set(bd1[0])
    w = w.at[WD1A_OFF + HIDDEN, D_AMB].set(1.0)                    # ones-producer row

    # band D: decoder layer-2 -> rows 96:160, lanes 0:40
    w = w.at[WD2A_OFF:WD2A_OFF + N_FEATURES, 0:HIDDEN].set(wd2.T)  # (64, 32)
    w = w.at[WD2A_OFF:WD2A_OFF + N_FEATURES, HIDDEN].set(bd2[0])

    return w


# ---- pure-JAX reference (same math, batch-major layout, unpacked params) ----------
def _reference_forward(x, eps, raw):
    (w1, b1, wmu, bmu, wlv, blv, proj, wd1, bd1, wd2, bd2) = raw
    hp = jax.lax.Precision.HIGHEST
    h = jnp.maximum(jnp.dot(x, w1, precision=hp) + b1, 0.0)
    u_int = jnp.dot(h, wmu, precision=hp) + bmu
    logvar = jnp.dot(h, wlv, precision=hp) + blv
    u = jnp.dot(u_int, proj, precision=hp)                    # (B, 8)
    var = jnp.exp(logvar) + 1e-8
    v = eps * jnp.sqrt(var)

    # hyperbolic
    uh = u[:, 1:3]
    nh = jnp.sqrt(jnp.sum(uh * uh, -1, keepdims=True))
    ch, rh = _cosh_sinh_ratio(nh)
    mu_h = jnp.concatenate([ch, rh * uh], axis=-1)
    vh = v[:, 0:2]
    inner = jnp.sum(mu_h[:, 1:3] * vh, -1, keepdims=True)
    coef = inner / (1.0 + mu_h[:, 0:1])
    pt = jnp.concatenate([coef * (mu_h[:, 0:1] + 1.0), vh + coef * mu_h[:, 1:3]], axis=-1)
    nn = jnp.sqrt(jnp.maximum(jnp.sum(pt[:, 1:3] ** 2, -1, keepdims=True) - pt[:, 0:1] ** 2, 0.0))
    c2, r2 = _cosh_sinh_ratio(nn)
    zh = c2 * mu_h + r2 * pt
    # euclidean
    mu_e = u[:, 3:5]
    ze = mu_e + v[:, 2:4]
    # spherical
    us = u[:, 6:8]
    ns = jnp.sqrt(jnp.sum(us * us, -1, keepdims=True))
    cs, rs = _cos_sin_ratio(ns)
    mu_s = jnp.concatenate([cs, rs * us], axis=-1)
    vs = v[:, 4:6]
    inner_s = jnp.sum(mu_s[:, 1:3] * vs, -1, keepdims=True)
    coef_s = -inner_s / (1.0 + mu_s[:, 0:1])
    pts = jnp.concatenate([coef_s * (mu_s[:, 0:1] + 1.0), vs + coef_s * mu_s[:, 1:3]], axis=-1)
    nns = jnp.sqrt(jnp.sum(pts * pts, -1, keepdims=True))
    cc, rr = _cos_sin_ratio(nns)
    zs = cc * mu_s + rr * pts

    z = jnp.concatenate([zh, ze, zs], axis=-1)
    z_mean = jnp.concatenate([mu_h, mu_e, mu_s], axis=-1)
    hd = jnp.maximum(jnp.dot(z, wd1, precision=hp) + bd1, 0.0)
    x_rec = jnp.dot(hd, wd2, precision=hp) + bd2
    return x_rec, z_mean, var


if __name__ == "__main__":
    key = jax.random.PRNGKey(0)
    k_par, k_x1, k_e1, k_x2, k_e2 = jax.random.split(key, 5)

    raw = _build_params(k_par)
    w_packed = pack_params(raw)

    def run_and_check(bsz, kx, ke):
        x = jax.random.normal(kx, (bsz, N_FEATURES), jnp.float32)
        # TODO(synk): torch's MultivariateNormal RNG stream is not bit-reproducible in
        #             JAX; the wrapped-normal Gaussian noise is drawn here and passed in.
        eps = jax.random.normal(ke, (bsz, D_INT), jnp.float32)

        x_rec, z_mean, sigmas = product_space_vae_forward(x, eps, w_packed)
        jax.block_until_ready((x_rec, z_mean, sigmas))

        assert x_rec.shape == (bsz, N_FEATURES)
        assert z_mean.shape == (bsz, D_AMB)
        assert all(s.shape == (bsz, 2, 2) for s in sigmas)
        assert bool(jnp.all(jnp.isfinite(x_rec))) and bool(jnp.all(jnp.isfinite(z_mean)))

        x_ref, zm_ref, var_ref = _reference_forward(x, eps, raw)
        var_k = jnp.concatenate(
            [jnp.diagonal(s, axis1=-2, axis2=-1) for s in sigmas], axis=-1)
        assert bool(jnp.allclose(x_rec, x_ref, atol=5e-2, rtol=5e-2))
        assert bool(jnp.allclose(z_mean, zm_ref, atol=5e-2, rtol=5e-2))
        assert bool(jnp.allclose(var_k, var_ref, atol=5e-2, rtol=5e-2))

    run_and_check(8, k_x1, k_e1)      # small batch: single tile, grid = (1,)
    run_and_check(256, k_x2, k_e2)    # batched: 2 x 128-lane tiles, weights stay resident
    print("KERNEL_OK")
</pallas_src>

<mosaic_0001>
module attributes {stable_mosaic.version = 11 : i64} {
  func.func @vae_fwd_kernel(%arg0: i32, %arg1: memref<128x8xf32, #tpu.memory_space<vmem>>, %arg2: memref<160x128xf32, #tpu.memory_space<vmem>>, %arg3: memref<80x8xf32, #tpu.memory_space<vmem>>) attributes {dimension_semantics = [#tpu.dimension_semantics<parallel>], iteration_bounds = array<i64: 1>, scalar_prefetch = 0 : i64, scratch_operands = 0 : i64, tpu.core_type = #tpu.core_type<tc>, window_params = [{transform_indices = @transform_0, window_bounds = array<i64: 128, 8>}, {pipeline_mode = #tpu.pipeline_mode<synchronous>, transform_indices = @transform_1, window_bounds = array<i64: 160, 128>}, {transform_indices = @transform_2, window_bounds = array<i64: 80, 8>}]} {
    %c0 = arith.constant 0 : index
    %c0_0 = arith.constant 0 : index
    %0 = vector.load %arg1[%c0, %c0_0] : memref<128x8xf32, #tpu.memory_space<vmem>>, vector<128x8xf32>
    %c0_1 = arith.constant 0 : index
    %c0_2 = arith.constant 0 : index
    %1 = vector.load %arg2[%c0_1, %c0_2] : memref<160x128xf32, #tpu.memory_space<vmem>>, vector<40x128xf32>
    %c40 = arith.constant 40 : index
    %c0_3 = arith.constant 0 : index
    %2 = vector.load %arg2[%c40, %c0_3] : memref<160x128xf32, #tpu.memory_space<vmem>>, vector<16x40xf32>
    %c56 = arith.constant 56 : index
    %c0_4 = arith.constant 0 : index
    %3 = vector.load %arg2[%c56, %c0_4] : memref<160x128xf32, #tpu.memory_space<vmem>>, vector<40x16xf32>
    %c96 = arith.constant 96 : index
    %c0_5 = arith.constant 0 : index
    %4 = vector.load %arg2[%c96, %c0_5] : memref<160x128xf32, #tpu.memory_space<vmem>>, vector<64x40xf32>
    %cst = arith.constant dense<0.000000e+00> : vector<40x8xf32>
    %5 = tpu.matmul %1, %0, %cst {dimension_numbers = #tpu.dot_dimension_numbers<[1], [0], [0], [1], [0, 0, 1, 1], [], []>} : vector<40x128xf32>, vector<128x8xf32>, vector<40x8xf32> -> vector<40x8xf32>
    %cst_6 = arith.constant 0.000000e+00 : f32
    %6 = vector.broadcast %cst_6 : f32 to vector<40x8xf32>
    %7 = arith.maximumf %5, %6 : vector<40x8xf32>
    %cst_7 = arith.constant dense<0.000000e+00> : vector<16x8xf32>
    %8 = tpu.matmul %2, %7, %cst_7 {dimension_numbers = #tpu.dot_dimension_numbers<[1], [0], [0], [1], [0, 0, 1, 1], [], []>} : vector<16x40xf32>, vector<40x8xf32>, vector<16x8xf32> -> vector<16x8xf32>
    %9 = vector.extract_strided_slice %8 {offsets = [8, 0], sizes = [6, 8], strides = [1, 1]} : vector<16x8xf32> to vector<6x8xf32>
    %10 = math.exp %9 : vector<6x8xf32>
    %cst_8 = arith.constant 9.99999993E-9 : f32
    %11 = vector.broadcast %cst_8 : f32 to vector<6x8xf32>
    %12 = arith.addf %10, %11 : vector<6x8xf32>
    %13 = vector.extract_strided_slice %0 {offsets = [64, 0], sizes = [6, 8], strides = [1, 1]} : vector<128x8xf32> to vector<6x8xf32>
    %14 = math.sqrt %12 : vector<6x8xf32>
    %15 = arith.mulf %13, %14 : vector<6x8xf32>
    %16 = vector.extract_strided_slice %8 {offsets = [1, 0], sizes = [1, 8], strides = [1, 1]} : vector<16x8xf32> to vector<1x8xf32>
    %17 = vector.extract_strided_slice %8 {offsets = [2, 0], sizes = [1, 8], strides = [1, 1]} : vector<16x8xf32> to vector<1x8xf32>
    %18 = vector.extract_strided_slice %15 {offsets = [0, 0], sizes = [1, 8], strides = [1, 1]} : vector<6x8xf32> to vector<1x8xf32>
    %19 = vector.extract_strided_slice %15 {offsets = [1, 0], sizes = [1, 8], strides = [1, 1]} : vector<6x8xf32> to vector<1x8xf32>
    %20 = arith.mulf %16, %16 : vector<1x8xf32>
    %21 = arith.mulf %17, %17 : vector<1x8xf32>
    %22 = arith.addf %20, %21 : vector<1x8xf32>
    %23 = math.sqrt %22 : vector<1x8xf32>
    %24 = math.exp %23 : vector<1x8xf32>
    %cst_9 = arith.constant 0.000000e+00 : f32
    %25 = vector.broadcast %cst_9 : f32 to vector<1x8xf32>
    %26 = arith.subf %25, %23 : vector<1x8xf32>
    %27 = math.exp %26 : vector<1x8xf32>
    %28 = arith.addf %24, %27 : vector<1x8xf32>
    %cst_10 = arith.constant 5.000000e-01 : f32
    %29 = vector.broadcast %cst_10 : f32 to vector<1x8xf32>
    %30 = arith.mulf %29, %28 : vector<1x8xf32>
    %31 = arith.subf %24, %27 : vector<1x8xf32>
    %cst_11 = arith.constant 5.000000e-01 : f32
    %32 = vector.broadcast %cst_11 : f32 to vector<1x8xf32>
    %33 = arith.mulf %32, %31 : vector<1x8xf32>
    %cst_12 = arith.constant 0.00999999977 : f32
    %34 = vector.broadcast %cst_12 : f32 to vector<1x8xf32>
    %35 = arith.cmpf olt, %23, %34 : vector<1x8xf32>
    %36 = arith.mulf %23, %23 : vector<1x8xf32>
    %cst_13 = arith.constant 0.166666672 : f32
    %37 = vector.broadcast %cst_13 : f32 to vector<1x8xf32>
    %38 = arith.mulf %36, %37 : vector<1x8xf32>
    %cst_14 = arith.constant 1.000000e+00 : f32
    %39 = vector.broadcast %cst_14 : f32 to vector<1x8xf32>
    %40 = arith.addf %39, %38 : vector<1x8xf32>
    %cst_15 = arith.constant 9.99999996E-13 : f32
    %41 = vector.broadcast %cst_15 : f32 to vector<1x8xf32>
    %42 = arith.maximumf %23, %41 : vector<1x8xf32>
    %43 = arith.divf %33, %42 : vector<1x8xf32>
    %44 = arith.select %35, %40, %43 : vector<1x8xi1>, vector<1x8xf32>
    %45 = arith.mulf %44, %16 : vector<1x8xf32>
    %46 = arith.mulf %44, %17 : vector<1x8xf32>
    %47 = arith.mulf %45, %18 : vector<1x8xf32>
    %48 = arith.mulf %46, %19 : vector<1x8xf32>
    %49 = arith.addf %47, %48 : vector<1x8xf32>
    %cst_16 = arith.constant 1.000000e+00 : f32
    %50 = vector.broadcast %cst_16 : f32 to vector<1x8xf32>
    %51 = arith.addf %50, %30 : vector<1x8xf32>
    %52 = arith.divf %49, %51 : vector<1x8xf32>
    %cst_17 = arith.constant 1.000000e+00 : f32
    %53 = vector.broadcast %cst_17 : f32 to vector<1x8xf32>
    %54 = arith.addf %30, %53 : vector<1x8xf32>
    %55 = arith.mulf %52, %54 : vector<1x8xf32>
    %56 = arith.mulf %52, %45 : vector<1x8xf32>
    %57 = arith.addf %18, %56 : vector<1x8xf32>
    %58 = arith.mulf %52, %46 : vector<1x8xf32>
    %59 = arith.addf %19, %58 : vector<1x8xf32>
    %60 = arith.mulf %57, %57 : vector<1x8xf32>
    %61 = arith.mulf %59, %59 : vector<1x8xf32>
    %62 = arith.addf %60, %61 : vector<1x8xf32>
    %63 = arith.mulf %55, %55 : vector<1x8xf32>
    %64 = arith.subf %62, %63 : vector<1x8xf32>
    %cst_18 = arith.constant 0.000000e+00 : f32
    %65 = vector.broadcast %cst_18 : f32 to vector<1x8xf32>
    %66 = arith.maximumf %64, %65 : vector<1x8xf32>
    %67 = math.sqrt %66 : vector<1x8xf32>
    %68 = math.exp %67 : vector<1x8xf32>
    %cst_19 = arith.constant 0.000000e+00 : f32
    %69 = vector.broadcast %cst_19 : f32 to vector<1x8xf32>
    %70 = arith.subf %69, %67 : vector<1x8xf32>
    %71 = math.exp %70 : vector<1x8xf32>
    %72 = arith.addf %68, %71 : vector<1x8xf32>
    %cst_20 = arith.constant 5.000000e-01 : f32
    %73 = vector.broadcast %cst_20 : f32 to vector<1x8xf32>
    %74 = arith.mulf %73, %72 : vector<1x8xf32>
    %75 = arith.subf %68, %71 : vector<1x8xf32>
    %cst_21 = arith.constant 5.000000e-01 : f32
    %76 = vector.broadcast %cst_21 : f32 to vector<1x8xf32>
    %77 = arith.mulf %76, %75 : vector<1x8xf32>
    %cst_22 = arith.constant 0.00999999977 : f32
    %78 = vector.broadcast %cst_22 : f32 to vector<1x8xf32>
    %79 = arith.cmpf olt, %67, %78 : vector<1x8xf32>
    %80 = arith.mulf %67, %67 : vector<1x8xf32>
    %cst_23 = arith.constant 0.166666672 : f32
    %81 = vector.broadcast %cst_23 : f32 to vector<1x8xf32>
    %82 = arith.mulf %80, %81 : vector<1x8xf32>
    %cst_24 = arith.constant 1.000000e+00 : f32
    %83 = vector.broadcast %cst_24 : f32 to vector<1x8xf32>
    %84 = arith.addf %83, %82 : vector<1x8xf32>
    %cst_25 = arith.constant 9.99999996E-13 : f32
    %85 = vector.broadcast %cst_25 : f32 to vector<1x8xf32>
    %86 = arith.maximumf %67, %85 : vector<1x8xf32>
    %87 = arith.divf %77, %86 : vector<1x8xf32>
    %88 = arith.select %79, %84, %87 : vector<1x8xi1>, vector<1x8xf32>
    %89 = arith.mulf %74, %30 : vector<1x8xf32>
    %90 = arith.mulf %88, %55 : vector<1x8xf32>
    %91 = arith.addf %89, %90 : vector<1x8xf32>
    %92 = arith.mulf %74, %45 : vector<1x8xf32>
    %93 = arith.mulf %88, %57 : vector<1x8xf32>
    %94 = arith.addf %92, %93 : vector<1x8xf32>
    %95 = arith.mulf %74, %46 : vector<1x8xf32>
    %96 = arith.mulf %88, %59 : vector<1x8xf32>
    %97 = arith.addf %95, %96 : vector<1x8xf32>
    %98 = vector.extract_strided_slice %8 {offsets = [3, 0], sizes = [2, 8], strides = [1, 1]} : vector<16x8xf32> to vector<2x8xf32>
    %99 = vector.extract_strided_slice %15 {offsets = [2, 0], sizes = [2, 8], strides = [1, 1]} : vector<6x8xf32> to vector<2x8xf32>
    %100 = arith.addf %98, %99 : vector<2x8xf32>
    %101 = vector.extract_strided_slice %8 {offsets = [6, 0], sizes = [1, 8], strides = [1, 1]} : vector<16x8xf32> to vector<1x8xf32>
    %102 = vector.extract_strided_slice %8 {offsets = [7, 0], sizes = [1, 8], strides = [1, 1]} : vector<16x8xf32> to vector<1x8xf32>
    %103 = vector.extract_strided_slice %15 {offsets = [4, 0], sizes = [1, 8], strides = [1, 1]} : vector<6x8xf32> to vector<1x8xf32>
    %104 = vector.extract_strided_slice %15 {offsets = [5, 0], sizes = [1, 8], strides = [1, 1]} : vector<6x8xf32> to vector<1x8xf32>
    %105 = arith.mulf %101, %101 : vector<1x8xf32>
    %106 = arith.mulf %102, %102 : vector<1x8xf32>
    %107 = arith.addf %105, %106 : vector<1x8xf32>
    %108 = math.sqrt %107 : vector<1x8xf32>
    %109 = math.cos %108 : vector<1x8xf32>
    %110 = math.sin %108 : vector<1x8xf32>
    %cst_26 = arith.constant 0.00999999977 : f32
    %111 = vector.broadcast %cst_26 : f32 to vector<1x8xf32>
    %112 = arith.cmpf olt, %108, %111 : vector<1x8xf32>
    %113 = arith.mulf %108, %108 : vector<1x8xf32>
    %cst_27 = arith.constant 0.166666672 : f32
    %114 = vector.broadcast %cst_27 : f32 to vector<1x8xf32>
    %115 = arith.mulf %113, %114 : vector<1x8xf32>
    %cst_28 = arith.constant 1.000000e+00 : f32
    %116 = vector.broadcast %cst_28 : f32 to vector<1x8xf32>
    %117 = arith.subf %116, %115 : vector<1x8xf32>
    %cst_29 = arith.constant 9.99999996E-13 : f32
    %118 = vector.broadcast %cst_29 : f32 to vector<1x8xf32>
    %119 = arith.maximumf %108, %118 : vector<1x8xf32>
    %120 = arith.divf %110, %119 : vector<1x8xf32>
    %121 = arith.select %112, %117, %120 : vector<1x8xi1>, vector<1x8xf32>
    %122 = arith.mulf %121, %101 : vector<1x8xf32>
    %123 = arith.mulf %121, %102 : vector<1x8xf32>
    %124 = arith.mulf %122, %103 : vector<1x8xf32>
    %125 = arith.mulf %123, %104 : vector<1x8xf32>
    %126 = arith.addf %124, %125 : vector<1x8xf32>
    %cst_30 = arith.constant 0.000000e+00 : f32
    %127 = vector.broadcast %cst_30 : f32 to vector<1x8xf32>
    %128 = arith.subf %127, %126 : vector<1x8xf32>
    %cst_31 = arith.constant 1.000000e+00 : f32
    %129 = vector.broadcast %cst_31 : f32 to vector<1x8xf32>
    %130 = arith.addf %129, %109 : vector<1x8xf32>
    %131 = arith.divf %128, %130 : vector<1x8xf32>
    %cst_32 = arith.constant 1.000000e+00 : f32
    %132 = vector.broadcast %cst_32 : f32 to vector<1x8xf32>
    %133 = arith.addf %109, %132 : vector<1x8xf32>
    %134 = arith.mulf %131, %133 : vector<1x8xf32>
    %135 = arith.mulf %131, %122 : vector<1x8xf32>
    %136 = arith.addf %103, %135 : vector<1x8xf32>
    %137 = arith.mulf %131, %123 : vector<1x8xf32>
    %138 = arith.addf %104, %137 : vector<1x8xf32>
    %139 = arith.mulf %134, %134 : vector<1x8xf32>
    %140 = arith.mulf %136, %136 : vector<1x8xf32>
    %141 = arith.addf %139, %140 : vector<1x8xf32>
    %142 = arith.mulf %138, %138 : vector<1x8xf32>
    %143 = arith.addf %141, %142 : vector<1x8xf32>
    %144 = math.sqrt %143 : vector<1x8xf32>
    %145 = math.cos %144 : vector<1x8xf32>
    %146 = math.sin %144 : vector<1x8xf32>
    %cst_33 = arith.constant 0.00999999977 : f32
    %147 = vector.broadcast %cst_33 : f32 to vector<1x8xf32>
    %148 = arith.cmpf olt, %144, %147 : vector<1x8xf32>
    %149 = arith.mulf %144, %144 : vector<1x8xf32>
    %cst_34 = arith.constant 0.166666672 : f32
    %150 = vector.broadcast %cst_34 : f32 to vector<1x8xf32>
    %151 = arith.mulf %149, %150 : vector<1x8xf32>
    %cst_35 = arith.constant 1.000000e+00 : f32
    %152 = vector.broadcast %cst_35 : f32 to vector<1x8xf32>
    %153 = arith.subf %152, %151 : vector<1x8xf32>
    %cst_36 = arith.constant 9.99999996E-13 : f32
    %154 = vector.broadcast %cst_36 : f32 to vector<1x8xf32>
    %155 = arith.maximumf %144, %154 : vector<1x8xf32>
    %156 = arith.divf %146, %155 : vector<1x8xf32>
    %157 = arith.select %148, %153, %156 : vector<1x8xi1>, vector<1x8xf32>
    %158 = arith.mulf %145, %109 : vector<1x8xf32>
    %159 = arith.mulf %157, %134 : vector<1x8xf32>
    %160 = arith.addf %158, %159 : vector<1x8xf32>
    %161 = arith.mulf %145, %122 : vector<1x8xf32>
    %162 = arith.mulf %157, %136 : vector<1x8xf32>
    %163 = arith.addf %161, %162 : vector<1x8xf32>
    %164 = arith.mulf %145, %123 : vector<1x8xf32>
    %165 = arith.mulf %157, %138 : vector<1x8xf32>
    %166 = arith.addf %164, %165 : vector<1x8xf32>
    %cst_37 = arith.constant 1.000000e+00 : f32
    %167 = vector.broadcast %cst_37 : f32 to vector<1x8xf32>
    %cst_38 = arith.constant 0.000000e+00 : f32
    %168 = vector.broadcast %cst_38 : f32 to vector<7x8xf32>
    %169 = tpu.concatenate %91, %94, %97, %100, %160, %163, %166, %167, %168 in 0 : vector<1x8xf32>, vector<1x8xf32>, vector<1x8xf32>, vector<2x8xf32>, vector<1x8xf32>, vector<1x8xf32>, vector<1x8xf32>, vector<1x8xf32>, vector<7x8xf32> -> vector<16x8xf32>
    %170 = tpu.concatenate %30, %45, %46, %98, %109, %122, %123 in 0 : vector<1x8xf32>, vector<1x8xf32>, vector<1x8xf32>, vector<2x8xf32>, vector<1x8xf32>, vector<1x8xf32>, vector<1x8xf32> -> vector<8x8xf32>
    %cst_39 = arith.constant dense<0.000000e+00> : vector<40x8xf32>
    %171 = tpu.matmul %3, %169, %cst_39 {dimension_numbers = #tpu.dot_dimension_numbers<[1], [0], [0], [1], [0, 0, 1, 1], [], []>} : vector<40x16xf32>, vector<16x8xf32>, vector<40x8xf32> -> vector<40x8xf32>
    %cst_40 = arith.constant 0.000000e+00 : f32
    %172 = vector.broadcast %cst_40 : f32 to vector<40x8xf32>
    %173 = arith.maximumf %171, %172 : vector<40x8xf32>
    %cst_41 = arith.constant dense<0.000000e+00> : vector<64x8xf32>
    %174 = tpu.matmul %4, %173, %cst_41 {dimension_numbers = #tpu.dot_dimension_numbers<[1], [0], [0], [1], [0, 0, 1, 1], [], []>} : vector<64x40xf32>, vector<40x8xf32>, vector<64x8xf32> -> vector<64x8xf32>
    %c0_42 = arith.constant 0 : index
    %c0_43 = arith.constant 0 : index
    %175 = vector.load %arg3[%c0_42, %c0_43] : memref<80x8xf32, #tpu.memory_space<vmem>>, vector<64x8xf32>
    tpu.vector_store %arg3[%c0_42, %c0_43], %174 {strides = array<i32>} : memref<80x8xf32, #tpu.memory_space<vmem>>, vector<64x8xf32>,
    %c64 = arith.constant 64 : index
    %c0_44 = arith.constant 0 : index
    %176 = vector.load %arg3[%c64, %c0_44] : memref<80x8xf32, #tpu.memory_space<vmem>>, vector<8x8xf32>
    tpu.vector_store %arg3[%c64, %c0_44], %170 {strides = array<i32>} : memref<80x8xf32, #tpu.memory_space<vmem>>, vector<8x8xf32>,
    %cst_45 = arith.constant 0.000000e+00 : f32
    %177 = vector.broadcast %cst_45 : f32 to vector<2x8xf32>
    %178 = tpu.concatenate %12, %177 in 0 : vector<6x8xf32>, vector<2x8xf32> -> vector<8x8xf32>
    %c72 = arith.constant 72 : index
    %c0_46 = arith.constant 0 : index
    %179 = vector.load %arg3[%c72, %c0_46] : memref<80x8xf32, #tpu.memory_space<vmem>>, vector<8x8xf32>
    tpu.vector_store %arg3[%c72, %c0_46], %178 {strides = array<i32>} : memref<80x8xf32, #tpu.memory_space<vmem>>, vector<8x8xf32>,
    return
  }
  func.func @transform_0(%arg0: i32) -> (i32, i32) {
    %c0_i32 = arith.constant 0 : i32
    %c0_i32_0 = arith.constant 0 : i32
    return %c0_i32, %arg0 : i32, i32
  }
  func.func @transform_1(%arg0: i32) -> (i32, i32) {
    %c0_i32 = arith.constant 0 : i32
    %c0_i32_0 = arith.constant 0 : i32
    %c0_i32_1 = arith.constant 0 : i32
    return %c0_i32, %c0_i32_0 : i32, i32
  }
  func.func @transform_2(%arg0: i32) -> (i32, i32) {
    %c0_i32 = arith.constant 0 : i32
    %c0_i32_0 = arith.constant 0 : i32
    return %c0_i32, %arg0 : i32, i32
  }
}

</mosaic_0001>

<llo_original>
// kernel: tpu_custom_call.1
$region0: #{tpu_custom_call.1}
  #allocation0 [shape = 'u32[]', space=smem, size = 0x4, offset = 0x4, fixed_abs, tag = 'smem constant byte address 0x4 - core index']
  #allocation1 [shape = 'u32[144,128]{1,0:T(1,128)}', space=vmem, size = 0x12000, scoped, tag = 'internal scratch']
  %s0 = inlined_call_operand.vmem [shape: f32[128,8], index: 0, kind: input, shape index: {}]
  %s1 = inlined_call_operand.hbm [shape: f32[160,128], index: 1, kind: input, shape index: {}]
  %s2 = inlined_call_operand.vmem [shape: f32[80,8], index: 2, kind: output, shape index: {}]
  %s3 = sld [smem:[#allocation0]]
  $region22: #{tpu_custom_call.1} parent=0
    _
  %s5 = ssub.s32 1, %s3
  %s6 = scalar_select 0, %s5, %s3
  $region1: #{tpu_custom_call.1} parent=0
    #allocation2 [shape = 'u8[81920]{0}', space=vmem, size = 0x14000, scoped, tag = 'input window, operand 1, single buffered']
    #allocation3 [shape = 's32[1]{0}', space=sflag, size = 0x4, scoped, tag = 'scoped memory for tpu_custom_call.1']
    %7 = vsyncpa [#allocation3], 0
    // Predicated region
    $region2: #{tpu_custom_call.1} parent=1 // pred_check
      _
    $region3: #{tpu_custom_call.1} parent=1 // pred_check_branch
      %9 = sbr.rel (0) target = $region5
    $region4: #{tpu_custom_call.1} parent=1 // pred_region
      _
    $region5: #{tpu_custom_call.1} parent=1 // pred_fallthru
      _
    // Predicated region
    $region6: #{tpu_custom_call.1} parent=1 // pred_check
      _
    $region7: #{tpu_custom_call.1} parent=1 // pred_check_branch
      %11 = sbr.rel (0) target = $region9
    $region8: #{tpu_custom_call.1} parent=1 // pred_region
      %s13 = ssub.s32 2560, 2560
      %14 = vsyncadd [#allocation3], %s13
      %s15 = sshll.u32 [#allocation2], 4
      %s16 = int_to_ptr.vmem [resolvable:$true] %s15
      %21 = dma.hbm_to_vmem [thread:$0]  %s1, 2560, %s16, [#allocation3], 128, 128, 8
    $region9: #{tpu_custom_call.1} parent=1 // pred_fallthru
      _
    // Predicated region
    $region10: #{tpu_custom_call.1} parent=1 // pred_check
      _
    $region11: #{tpu_custom_call.1} parent=1 // pred_check_branch
      %23 = sbr.rel (0) target = $region13
    $region12: #{tpu_custom_call.1} parent=1 // pred_region
      %24 = dma.done [#allocation3], 2560
    $region13: #{tpu_custom_call.1} parent=1 // pred_fallthru
      _
    %v25 = vld [vmem:[%s0] sm:$0xff]
    %v26 = vld [vmem:[%s0 + $0x8] sm:$0xff]
    %v27 = vld [vmem:[%s0 + $0x10] sm:$0xff]
    %v28 = vld [vmem:[%s0 + $0x18] sm:$0xff]
    %v29 = vld [vmem:[%s0 + $0x20] sm:$0xff]
    %v30 = vld [vmem:[%s0 + $0x28] sm:$0xff]
    %v31 = vld [vmem:[%s0 + $0x30] sm:$0xff]
    %v32 = vld [vmem:[%s0 + $0x38] sm:$0xff]
    %v33 = vld [vmem:[%s0 + $0x40] sm:$0xff]
    %v34 = vld [vmem:[%s0 + $0x48] sm:$0xff]
    %v35 = vld [vmem:[%s0 + $0x50] sm:$0xff]
    %v36 = vld [vmem:[%s0 + $0x58] sm:$0xff]
    %v37 = vld [vmem:[%s0 + $0x60] sm:$0xff]
    %v38 = vld [vmem:[%s0 + $0x68] sm:$0xff]
    %v39 = vld [vmem:[%s0 + $0x70] sm:$0xff]
    %v40 = vld [vmem:[%s0 + $0x78] sm:$0xff]
    %v41 = vld [vmem:[#allocation2] sm:$0xff]
    %v42 = vld [vmem:[#allocation2 + $0x8] sm:$0xff]
    %v43 = vld [vmem:[#allocation2 + $0x10] sm:$0xff]
    %v44 = vld [vmem:[#allocation2 + $0x18] sm:$0xff]
    %v45 = vld [vmem:[#allocation2 + $0x20] sm:$0xff]
    %v46 = vld [vmem:[#allocation2 + $0x28] sm:$0xff]
    %v47 = vld [vmem:[#allocation2 + $0x30] sm:$0xff]
    %v48 = vld [vmem:[#allocation2 + $0x38] sm:$0xff]
    %v49 = vld [vmem:[#allocation2 + $0x40] sm:$0xff]
    %v50 = vld [vmem:[#allocation2 + $0x48] sm:$0xff]
    %v51 = vld [vmem:[#allocation2 + $0x50] sm:$0xff]
    %v52 = vld [vmem:[#allocation2 + $0x58] sm:$0xff]
    %v53 = vld [vmem:[#allocation2 + $0x60] sm:$0xff]
    %v54 = vld [vmem:[#allocation2 + $0x68] sm:$0xff]
    %v55 = vld [vmem:[#allocation2 + $0x70] sm:$0xff]
    %v56 = vld [vmem:[#allocation2 + $0x78] sm:$0xff]
    %v57 = vld [vmem:[#allocation2 + $0x80] sm:$0xff]
    %v58 = vld [vmem:[#allocation2 + $0x88] sm:$0xff]
    %v59 = vld [vmem:[#allocation2 + $0x90] sm:$0xff]
    %v60 = vld [vmem:[#allocation2 + $0x98] sm:$0xff]
    %61 = vmatprep.subr.mxu0 0.0
    %62 = vmatpush1.msra.mxu0 %v25
    %63 = vmatprep.subr.mxu0 0.0
    %64 = vmatpush1.msra.mxu0 %v26
    %65 = vmatprep.subr.mxu0 0.0
    %66 = vmatpush1.msra.mxu0 %v27
    %67 = vmatprep.subr.mxu0 0.0
    %68 = vmatpush1.msra.mxu0 %v28
    %69 = vmatprep.subr.mxu0 0.0
    %70 = vmatpush1.msra.mxu0 %v29
    %71 = vmatprep.subr.mxu0 0.0
    %72 = vmatpush1.msra.mxu0 %v30
    %73 = vmatprep.subr.mxu0 0.0
    %74 = vmatpush1.msra.mxu0 %v31
    %75 = vmatprep.subr.mxu0 0.0
    %76 = vmatpush1.msra.mxu0 %v32
    %77 = vmatprep.subr.mxu0 0.0
    %78 = vmatpush1.msra.mxu0 %v33
    %79 = vmatprep.subr.mxu0 0.0
    %80 = vmatpush1.msra.mxu0 %v34
    %81 = vmatprep.subr.mxu0 0.0
    %82 = vmatpush1.msra.mxu0 %v35
    %83 = vmatprep.subr.mxu0 0.0
    %84 = vmatpush1.msra.mxu0 %v36
    %85 = vmatprep.subr.mxu0 0.0
    %86 = vmatpush1.msra.mxu0 %v37
    %87 = vmatprep.subr.mxu0 0.0
    %88 = vmatpush1.msra.mxu0 %v38
    %89 = vmatprep.subr.mxu0 0.0
    %90 = vmatpush1.msra.mxu0 %v39
    %91 = vmatprep.subr.mxu0 0.0
    %92 = vmatpush1.msra.mxu0 %v40
    %93 = vmatprep.subr.mxu0 0.0
    %94 = vmatpush1.msra.mxu0 0.0
    %95 = vmatprep.subr.mxu0 0.0
    %96 = vmatpush1.msra.mxu0 0.0
    %97 = vmatprep.subr.mxu0 0.0
    %98 = vmatpush1.msra.mxu0 0.0
    %99 = vmatprep.subr.mxu0 0.0
    %100 = vmatpush1.msra.mxu0 0.0
    %101 = vmatprep.subr.mxu0 0.0
    %102 = vmatpush1.msra.mxu0 0.0
    %103 = vmatprep.subr.mxu0 0.0
    %104 = vmatpush1.msra.mxu0 0.0
    %105 = vmatprep.subr.mxu0 0.0
    %106 = vmatpush1.msra.mxu0 0.0
    %107 = vmatprep.subr.mxu0 0.0
    %108 = vmatpush1.msra.mxu0 0.0
    %109 = vmatprep.subr.mxu0 0.0
    %110 = vmatpush1.msra.mxu0 0.0
    %111 = vmatprep.subr.mxu0 0.0
    %112 = vmatpush1.msra.mxu0 0.0
    %113 = vmatprep.subr.mxu0 0.0
    %114 = vmatpush1.msra.mxu0 0.0
    %115 = vmatprep.subr.mxu0 0.0
    %116 = vmatpush1.msra.mxu0 0.0
    %117 = vmatprep.subr.mxu0 0.0
    %118 = vmatpush1.msra.mxu0 0.0
    %119 = vmatprep.subr.mxu0 0.0
    %120 = vmatpush1.msra.mxu0 0.0
    %121 = vmatprep.subr.mxu0 0.0
    %122 = vmatpush1.msra.mxu0 0.0
    %123 = vmatprep.subr.mxu0 0.0
    %124 = vmatpush1.msra.mxu0 0.0
    %125 = vmatprep.mubr.f32.mxu0 0.0
    %126 = vmatmul.mubr.f32.gmra.mrb[0].mxu0 %v41
    %v127 = vpop.f32.mrb[0].mxu0
    %v128 = vadd.f32 0.0, %v127
    %v129 = vpop.f32.mrb[0].mxu0
    %130 = vmatprep.mubr.f32.mxu0 0.0
    %131 = vmatmul.mubr.f32.gmra.mrb[0].mxu0 %v42
    %v132 = vpop.f32.mrb[0].mxu0
    %v133 = vadd.f32 0.0, %v132
    %v134 = vpop.f32.mrb[0].mxu0
    %135 = vmatprep.mubr.f32.mxu0 0.0
    %136 = vmatmul.mubr.f32.gmra.mrb[0].mxu0 %v43
    %v137 = vpop.f32.mrb[0].mxu0
    %v138 = vadd.f32 0.0, %v137
    %v139 = vpop.f32.mrb[0].mxu0
    %140 = vmatprep.mubr.f32.mxu0 0.0
    %141 = vmatmul.mubr.f32.gmra.mrb[0].mxu0 %v44
    %v142 = vpop.f32.mrb[0].mxu0
    %v143 = vadd.f32 0.0, %v142
    %v144 = vpop.f32.mrb[0].mxu0
    %145 = vmatprep.mubr.f32.mxu0 0.0
    %146 = vmatmul.mubr.f32.gmra.mrb[0].mxu0 %v45
    %v147 = vpop.f32.mrb[0].mxu0
    %v148 = vadd.f32 0.0, %v147
    %v149 = vpop.f32.mrb[0].mxu0
    %150 = vdwg.mxu0
    %v151 = vmax.f32 %v128, 0.0
    %v152 = vmax.f32 %v133, 0.0
    %v153 = vmax.f32 %v138, 0.0
    %v154 = vmax.f32 %v143, 0.0
    %v155 = vmax.f32 %v148, 0.0
    %vm156 = vcmask 326656
    %v158 = vsel %vm156, %v46, 0
    %v161 = vsel %vm156, %v47, 0
    %163 = vmatprep.subr.mxu0 0.0
    %164 = vmatpush1.msra.mxu0 %v151
    %165 = vmatprep.subr.mxu0 0.0
    %166 = vmatpush1.msra.mxu0 %v152
    %167 = vmatprep.subr.mxu0 0.0
    %168 = vmatpush1.msra.mxu0 %v153
    %169 = vmatprep.subr.mxu0 0.0
    %170 = vmatpush1.msra.mxu0 %v154
    %171 = vmatprep.subr.mxu0 0.0
    %172 = vmatpush1.msra.mxu0 %v155
    %173 = vmatprep.subr.mxu0 0.0
    %174 = vmatpush1.msra.mxu0 0.0
    %175 = vmatprep.subr.mxu0 0.0
    %176 = vmatpush1.msra.mxu0 0.0
    %177 = vmatprep.subr.mxu0 0.0
    %178 = vmatpush1.msra.mxu0 0.0
    %179 = vmatprep.subr.mxu0 0.0
    %180 = vmatpush1.msra.mxu0 0.0
    %181 = vmatprep.subr.mxu0 0.0
    %182 = vmatpush1.msra.mxu0 0.0
    %183 = vmatprep.subr.mxu0 0.0
    %184 = vmatpush1.msra.mxu0 0.0
    %185 = vmatprep.subr.mxu0 0.0
    %186 = vmatpush1.msra.mxu0 0.0
    %187 = vmatprep.subr.mxu0 0.0
    %188 = vmatpush1.msra.mxu0 0.0
    %189 = vmatprep.subr.mxu0 0.0
    %190 = vmatpush1.msra.mxu0 0.0
    %191 = vmatprep.subr.mxu0 0.0
    %192 = vmatpush1.msra.mxu0 0.0
    %193 = vmatprep.subr.mxu0 0.0
    %194 = vmatpush1.msra.mxu0 0.0
    %195 = vmatprep.subr.mxu0 0.0
    %196 = vmatpush1.msra.mxu0 0.0
    %197 = vmatprep.subr.mxu0 0.0
    %198 = vmatpush1.msra.mxu0 0.0
    %199 = vmatprep.subr.mxu0 0.0
    %200 = vmatpush1.msra.mxu0 0.0
    %201 = vmatprep.subr.mxu0 0.0
    %202 = vmatpush1.msra.mxu0 0.0
    %203 = vmatprep.subr.mxu0 0.0
    %204 = vmatpush1.msra.mxu0 0.0
    %205 = vmatprep.subr.mxu0 0.0
    %206 = vmatpush1.msra.mxu0 0.0
    %207 = vmatprep.subr.mxu0 0.0
    %208 = vmatpush1.msra.mxu0 0.0
    %209 = vmatprep.subr.mxu0 0.0
    %210 = vmatpush1.msra.mxu0 0.0
    %211 = vmatprep.subr.mxu0 0.0
    %212 = vmatpush1.msra.mxu0 0.0
    %213 = vmatprep.subr.mxu0 0.0
    %214 = vmatpush1.msra.mxu0 0.0
    %215 = vmatprep.subr.mxu0 0.0
    %216 = vmatpush1.msra.mxu0 0.0
    %217 = vmatprep.subr.mxu0 0.0
    %218 = vmatpush1.msra.mxu0 0.0
    %219 = vmatprep.subr.mxu0 0.0
    %220 = vmatpush1.msra.mxu0 0.0
    %221 = vmatprep.subr.mxu0 0.0
    %222 = vmatpush1.msra.mxu0 0.0
    %223 = vmatprep.subr.mxu0 0.0
    %224 = vmatpush1.msra.mxu0 0.0
    %225 = vmatprep.subr.mxu0 0.0
    %226 = vmatpush1.msra.mxu0 0.0
    %227 = vmatprep.mubr.f32.mxu0 0.0
    %228 = vmatmul.mubr.f32.gmra.mrb[0].mxu0 %v158
    %v229 = vpop.f32.mrb[0].mxu0
    %v230 = vadd.f32 0.0, %v229
    %v231 = vpop.f32.mrb[0].mxu0
    %232 = vmatprep.mubr.f32.mxu0 0.0
    %233 = vmatmul.mubr.f32.gmra.mrb[0].mxu0 %v161
    %v234 = vpop.f32.mrb[0].mxu0
    %v235 = vadd.f32 0.0, %v234
    %v236 = vpop.f32.mrb[0].mxu0
    %237 = vdwg.mxu0
    %v238 = vmul.f32 %v235, 1.442695
    %v239 = vpow.pop %v238
    %v240 = vadd.f32 %v239, 1e-08
    %v241 = vrsqrt.pop %v240
    %v242 = vmul.f32 %v240, %v241
    %vm243 = vcmp.eq.f32.partialorder %v240, inf
    %v244 = vsel %vm243, %v240, %v242
    %vm245 = vcmp.eq.f32.partialorder %v240, 0.0
    %v246 = vand.u32 %v240, 2147483648
    %v247 = vsel %vm245, %v246, %v244
    %v248 = vmul.f32 %v33, %v247
    %v249 = vmul.f32 %v230, %v230
    %v251 = vrot.slane %v249, 1
    %v253 = vadd.f32 %v249, %v251
    %v254 = vrsqrt.pop %v253
    %v255 = vmul.f32 %v253, %v254
    %vm256 = vcmp.eq.f32.partialorder %v253, inf
    %v257 = vsel %vm256, %v253, %v255
    %vm258 = vcmp.eq.f32.partialorder %v253, 0.0
    %v259 = vand.u32 %v253, 2147483648
    %v260 = vsel %vm258, %v259, %v257
    %v261 = vmul.f32 %v260, 1.442695
    %v262 = vpow.pop %v261
    %v263 = vsub.f32 0.0, %v260
    %v264 = vmul.f32 %v263, 1.442695
    %v265 = vpow.pop %v264
    %v266 = vadd.f32 %v262, %v265
    %v267 = vmul.f32 %v266, 0.5
    %v268 = vsub.f32 %v262, %v265
    %v269 = vmul.f32 %v268, 0.5
    %vm270 = vcmp.lt.f32.partialorder %v260, 0.01
    %v271 = vmul.f32 %v260, %v260
    %v272 = vmul.f32 %v271, 0.16666667
    %v273 = vadd.f32 %v272, 1.0
    %v274 = vmax.f32 %v260, 1e-12
    %v275 = vrcp.pop %v274
    %v276 = vmul.f32 %v269, %v275
    %v277 = vsel %vm270, %v273, %v276
    %v278 = vmul.f32 %v277, %v230
    %v280 = vrot.slane %v230, 1
    %v282 = vmul.f32 %v277, %v280
    %v284 = vrot.slane %v248, 7
    %v286 = vmul.f32 %v278, %v284
    %v287 = vmul.f32 %v282, %v248
    %v288 = vadd.f32 %v286, %v287
    %v289 = vadd.f32 %v267, 1.0
    %v290 = vrcp.pop %v289
    %v291 = vmul.f32 %v288, %v290
    %v292 = vmul.f32 %v291, %v289
    %v293 = vmul.f32 %v291, %v278
    %v295 = vrot.slane %v293, 1
    %v297 = vadd.f32 %v248, %v295
    %v298 = vmul.f32 %v291, %v282
    %v299 = vadd.f32 %v248, %v298
    %v300 = vmul.f32 %v297, %v297
    %v301 = vmul.f32 %v299, %v299
    %v303 = vrot.slane %v301, 1
    %v305 = vadd.f32 %v300, %v303
    %v306 = vmul.f32 %v292, %v292
    %v308 = vrot.slane %v306, 1
    %v310 = vsub.f32 %v305, %v308
    %v311 = vmax.f32 %v310, 0.0
    %v312 = vrsqrt.pop %v311
    %v313 = vmul.f32 %v311, %v312
    %vm314 = vcmp.eq.f32.partialorder %v311, inf
    %v315 = vsel %vm314, %v311, %v313
    %vm316 = vcmp.eq.f32.partialorder %v311, 0.0
    %v317 = vand.u32 %v311, 2147483648
    %v318 = vsel %vm316, %v317, %v315
    %v319 = vmul.f32 %v318, 1.442695
    %v320 = vpow.pop %v319
    %v321 = vsub.f32 0.0, %v318
    %v322 = vmul.f32 %v321, 1.442695
    %v323 = vpow.pop %v322
    %v324 = vadd.f32 %v320, %v323
    %v325 = vmul.f32 %v324, 0.5
    %v326 = vsub.f32 %v320, %v323
    %v327 = vmul.f32 %v326, 0.5
    %vm328 = vcmp.lt.f32.partialorder %v318, 0.01
    %v329 = vmul.f32 %v318, %v318
    %v330 = vmul.f32 %v329, 0.16666667
    %v331 = vadd.f32 %v330, 1.0
    %v332 = vmax.f32 %v318, 1e-12
    %v333 = vrcp.pop %v332
    %v334 = vmul.f32 %v327, %v333
    %v335 = vsel %vm328, %v331, %v334
    %v337 = vrot.slane %v267, 1
    %v339 = vmul.f32 %v325, %v337
    %v341 = vrot.slane %v292, 1
    %v343 = vmul.f32 %v335, %v341
    %v344 = vadd.f32 %v339, %v343
    %v346 = vrot.slane %v278, 1
    %v348 = vmul.f32 %v325, %v346
    %v349 = vmul.f32 %v335, %v297
    %v350 = vadd.f32 %v348, %v349
    %v352 = vrot.slane %v282, 1
    %v354 = vmul.f32 %v325, %v352
    %v356 = vrot.slane %v299, 1
    %v358 = vmul.f32 %v335, %v356
    %v359 = vadd.f32 %v354, %v358
    %v360 = vadd.f32 %v230, %v284
    %v361 = vand.u32 2147483647, %v260
    %vm362 = vcmp.le.f32.partialorder %v361, 0.7853982
    %vm363 = vcmp.lt.s32.totalorder %v260, 0
    %v364 = vand.u32 %v260, 2139095040
    %v365 = vshrl.u32 %v364, 23
    %v366 = vsub.s32 %v365, 127
    %v367 = vand.u32 2147483647, %v260
    %v368 = vand.u32 %v367, 8388607
    %v369 = vor.u32 %v368, 8388608
    %v370 = vsub.s32 0, %v369
    %v371 = vadd.s32 %v366, 1
    %vm372 = vcmp.gt.s32.totalorder %v371, 0
    %v373 = vsel %vm372, %v371, 0
    %v374 = vshrl.u32 %v373, 5
    %v375 = vand.u32 %v373, 31
    %v376 = vsub.s32 32, %v375
    %v377 = vshrl.u32 683565275, %v376
    %v378 = vshll.u32 683565275, %v375
    %v379 = vshrl.u32 2475754826, %v376
    %v380 = vor.u32 %v378, %v379
    %v381 = vshll.u32 2475754826, %v375
    %v382 = vshrl.u32 2131351028, %v376
    %v383 = vor.u32 %v381, %v382
    %v384 = vshll.u32 2131351028, %v375
    %v385 = vshrl.u32 2102212464, %v376
    %v386 = vor.u32 %v384, %v385
    %v387 = vshll.u32 2102212464, %v375
    %v388 = vshrl.u32 920167782, %v376
    %v389 = vor.u32 %v387, %v388
    %v390 = vshll.u32 920167782, %v375
    %v391 = vshrl.u32 1326507024, %v376
    %v392 = vor.u32 %v390, %v391
    %vm393 = vcmp.lt.s32.totalorder %v374, 1
    %vm394 = vcmp.lt.s32.totalorder %v374, 2
    %vm395 = vcmp.lt.s32.totalorder %v374, 3
    %vm396 = vcmp.lt.s32.totalorder %v374, 4
    %v397 = vsel %vm393, %v377, %v380
    %v398 = vsel %vm396, %v386, 2102212464
    %v399 = vsel %vm395, %v383, %v398
    %v400 = vsel %vm394, %v397, %v399
    %v401 = vsel %vm393, %v380, %v383
    %v402 = vsel %vm396, %v389, 920167782
    %v403 = vsel %vm395, %v386, %v402
    %v404 = vsel %vm394, %v401, %v403
    %v405 = vsel %vm393, %v383, %v386
    %v406 = vsel %vm396, %v392, 1326507024
    %v407 = vsel %vm395, %v389, %v406
    %v408 = vsel %vm394, %v405, %v407
    %v409 = vshll.u32 %v369, 8
    %v410 = vmul.u32.u64.compose %v409, %v408
    %v411 = vextract.low.u32 %v410
    %v412 = vextract.high.u32 %v410
    %v413 = vmul.u32.u64.compose %v409, %v404
    %v414 = vextract.low.u32 %v413
    %v415 = vextract.high.u32 %v413
    %v416 = vmul.u32 %v409, %v400
    %v417 = vadd.s32 %v412, %v414
    %vm418 = vc.u32 %v412, %v414
    %v419 = vadd.s32 %v415, 1
    %v420 = vsel %vm418, %v419, %v415
    %v421 = vadd.s32 %v416, %v420
    %v422 = vadd.s32 %v421, 536870912
    %v423 = vshrl.u32 %v422, 30
    %v424 = vshll.u32 %v423, 30
    %v425 = vsub.s32 %v421, %v424
    %vm426 = vcmp.lt.s32.totalorder %v425, 0
    %v427 = vsub.s32 0, %v425
    %v428 = vsel %vm426, %v427, %v425
    %v429 = vclz %v428
    %v430 = vsub.s32 %v429, 2
    %vm431 = vcmp.gt.s32.totalorder 0, %v430
    %v432 = vsel %vm431, 0, %v430
    %v433 = vsub.s32 32, %v432
    %v434 = vshll.u32 %v425, %v432
    %v435 = vshrl.u32 %v417, %v433
    %v436 = vor.u32 %v434, %v435
    %v437 = vsub.s32 4294967266, %v432
    %v438 = vadd.s32 %v437, 127
    %v439 = vshll.u32 %v438, 23
    %v440 = vor.u32 4788187, %v439
    %v441 = vand.u32 2147483647, %v440
    %v443 = vcvt.s32.f32 %v436
    %v444 = vmul.f32 %v443, %v441
    %v445 = vxor.u32 %v444, 2147483648
    %v446 = vsel %vm363, %v445, %v444
    %v447 = vsub.s32 4, %v423
    %v448 = vsel %vm363, %v447, %v423
    %v449 = vsel %vm362, %v260, %v446
    %v450 = vsel %vm362, 0, %v448
    %v451 = vcosq.f32.pop %v449
    %v452 = vsinq.f32.pop %v449
    %vm453 = vweird.f32 %v260
    %v454 = vand.u32 %v450, 3
    %vm455 = vcmp.lt.s32.totalorder %v454, 2
    %vm456 = vcmp.eq.s32.totalorder %v454, 0
    %v457 = vxor.u32 %v452, 2147483648
    %v458 = vsel %vm456, %v451, %v457
    %vm459 = vcmp.eq.s32.totalorder %v454, 2
    %v460 = vxor.u32 %v451, 2147483648
    %v461 = vsel %vm459, %v460, %v452
    %v462 = vsel %vm455, %v458, %v461
    %v463 = vsel %vm453, nan, %v462
    %v464 = vand.u32 2147483647, %v260
    %vm465 = vcmp.le.f32.partialorder %v464, 0.7853982
    %vm466 = vcmp.lt.s32.totalorder %v260, 0
    %v467 = vand.u32 %v260, 2139095040
    %v468 = vshrl.u32 %v467, 23
    %v469 = vsub.s32 %v468, 127
    %v470 = vand.u32 2147483647, %v260
    %v471 = vand.u32 %v470, 8388607
    %v472 = vor.u32 %v471, 8388608
    %v473 = vsub.s32 0, %v472
    %v474 = vadd.s32 %v469, 1
    %vm475 = vcmp.gt.s32.totalorder %v474, 0
    %v476 = vsel %vm475, %v474, 0
    %v477 = vshrl.u32 %v476, 5
    %v478 = vand.u32 %v476, 31
    %v479 = vsub.s32 32, %v478
    %v480 = vshrl.u32 683565275, %v479
    %v481 = vshll.u32 683565275, %v478
    %v482 = vshrl.u32 2475754826, %v479
    %v483 = vor.u32 %v481, %v482
    %v484 = vshll.u32 2475754826, %v478
    %v485 = vshrl.u32 2131351028, %v479
    %v486 = vor.u32 %v484, %v485
    %v487 = vshll.u32 2131351028, %v478
    %v488 = vshrl.u32 2102212464, %v479
    %v489 = vor.u32 %v487, %v488
    %v490 = vshll.u32 2102212464, %v478
    %v491 = vshrl.u32 920167782, %v479
    %v492 = vor.u32 %v490, %v491
    %v493 = vshll.u32 920167782, %v478
    %v494 = vshrl.u32 1326507024, %v479
    %v495 = vor.u32 %v493, %v494
    %vm496 = vcmp.lt.s32.totalorder %v477, 1
    %vm497 = vcmp.lt.s32.totalorder %v477, 2
    %vm498 = vcmp.lt.s32.totalorder %v477, 3
    %vm499 = vcmp.lt.s32.totalorder %v477, 4
    %v500 = vsel %vm496, %v480, %v483
    %v501 = vsel %vm499, %v489, 2102212464
    %v502 = vsel %vm498, %v486, %v501
    %v503 = vsel %vm497, %v500, %v502
    %v504 = vsel %vm496, %v483, %v486
    %v505 = vsel %vm499, %v492, 920167782
    %v506 = vsel %vm498, %v489, %v505
    %v507 = vsel %vm497, %v504, %v506
    %v508 = vsel %vm496, %v486, %v489
    %v509 = vsel %vm499, %v495, 1326507024
    %v510 = vsel %vm498, %v492, %v509
    %v511 = vsel %vm497, %v508, %v510
    %v512 = vshll.u32 %v472, 8
    %v513 = vmul.u32.u64.compose %v512, %v511
    %v514 = vextract.low.u32 %v513
    %v515 = vextract.high.u32 %v513
    %v516 = vmul.u32.u64.compose %v512, %v507
    %v517 = vextract.low.u32 %v516
    %v518 = vextract.high.u32 %v516
    %v519 = vmul.u32 %v512, %v503
    %v520 = vadd.s32 %v515, %v517
    %vm521 = vc.u32 %v515, %v517
    %v522 = vadd.s32 %v518, 1
    %v523 = vsel %vm521, %v522, %v518
    %v524 = vadd.s32 %v519, %v523
    %v525 = vadd.s32 %v524, 536870912
    %v526 = vshrl.u32 %v525, 30
    %v527 = vshll.u32 %v526, 30
    %v528 = vsub.s32 %v524, %v527
    %vm529 = vcmp.lt.s32.totalorder %v528, 0
    %v530 = vsub.s32 0, %v528
    %v531 = vsel %vm529, %v530, %v528
    %v532 = vclz %v531
    %v533 = vsub.s32 %v532, 2
    %vm534 = vcmp.gt.s32.totalorder 0, %v533
    %v535 = vsel %vm534, 0, %v533
    %v536 = vsub.s32 32, %v535
    %v537 = vshll.u32 %v528, %v535
    %v538 = vshrl.u32 %v520, %v536
    %v539 = vor.u32 %v537, %v538
    %v540 = vsub.s32 4294967266, %v535
    %v541 = vadd.s32 %v540, 127
    %v542 = vshll.u32 %v541, 23
    %v543 = vor.u32 4788187, %v542
    %v544 = vand.u32 2147483647, %v543
    %v546 = vcvt.s32.f32 %v539
    %v547 = vmul.f32 %v546, %v544
    %v548 = vxor.u32 %v547, 2147483648
    %v549 = vsel %vm466, %v548, %v547
    %v550 = vsub.s32 4, %v526
    %v551 = vsel %vm466, %v550, %v526
    %v552 = vsel %vm465, %v260, %v549
    %v553 = vsel %vm465, 0, %v551
    %v554 = vcosq.f32.pop %v552
    %v555 = vsinq.f32.pop %v552
    %vm556 = vweird.f32 %v260
    %v557 = vadd.s32 %v553, 3
    %v558 = vand.u32 %v557, 3
    %vm559 = vcmp.lt.s32.totalorder %v558, 2
    %vm560 = vcmp.eq.s32.totalorder %v558, 0
    %v561 = vxor.u32 %v555, 2147483648
    %v562 = vsel %vm560, %v554, %v561
    %vm563 = vcmp.eq.s32.totalorder %v558, 2
    %v564 = vxor.u32 %v554, 2147483648
    %v565 = vsel %vm563, %v564, %v555
    %v566 = vsel %vm559, %v562, %v565
    %v567 = vsel %vm556, nan, %v566
    %v568 = vsub.f32 1.0, %v272
    %v569 = vmul.f32 %v567, %v275
    %v570 = vsel %vm270, %v568, %v569
    %v571 = vmul.f32 %v570, %v230
    %v572 = vmul.f32 %v570, %v280
    %v573 = vrot.slane %v248, 6
    %v575 = vmul.f32 %v571, %v573
    %v576 = vmul.f32 %v572, %v284
    %v577 = vadd.f32 %v575, %v576
    %v578 = vsub.f32 0.0, %v577
    %v579 = vadd.f32 %v463, 1.0
    %v580 = vrcp.pop %v579
    %v581 = vmul.f32 %v578, %v580
    %v582 = vmul.f32 %v581, %v579
    %v583 = vmul.f32 %v581, %v571
    %v585 = vrot.slane %v583, 2
    %v587 = vadd.f32 %v248, %v585
    %v588 = vmul.f32 %v581, %v572
    %v590 = vrot.slane %v588, 1
    %v592 = vadd.f32 %v248, %v590
    %v593 = vmul.f32 %v582, %v582
    %v594 = vmul.f32 %v587, %v587
    %v596 = vrot.slane %v594, 6
    %v598 = vadd.f32 %v593, %v596
    %v599 = vmul.f32 %v592, %v592
    %v601 = vrot.slane %v599, 7
    %v603 = vadd.f32 %v598, %v601
    %v604 = vrsqrt.pop %v603
    %v605 = vmul.f32 %v603, %v604
    %vm606 = vcmp.eq.f32.partialorder %v603, inf
    %v607 = vsel %vm606, %v603, %v605
    %vm608 = vcmp.eq.f32.partialorder %v603, 0.0
    %v609 = vand.u32 %v603, 2147483648
    %v610 = vsel %vm608, %v609, %v607
    %v611 = vand.u32 2147483647, %v610
    %vm612 = vcmp.le.f32.partialorder %v611, 0.7853982
    %vm613 = vcmp.lt.s32.totalorder %v610, 0
    %v614 = vand.u32 %v610, 2139095040
    %v615 = vshrl.u32 %v614, 23
    %v616 = vsub.s32 %v615, 127
    %v617 = vand.u32 2147483647, %v610
    %v618 = vand.u32 %v617, 8388607
    %v619 = vor.u32 %v618, 8388608
    %v620 = vsub.s32 0, %v619
    %v621 = vadd.s32 %v616, 1
    %vm622 = vcmp.gt.s32.totalorder %v621, 0
    %v623 = vsel %vm622, %v621, 0
    %v624 = vshrl.u32 %v623, 5
    %v625 = vand.u32 %v623, 31
    %v626 = vsub.s32 32, %v625
    %v627 = vshrl.u32 683565275, %v626
    %v628 = vshll.u32 683565275, %v625
    %v629 = vshrl.u32 2475754826, %v626
    %v630 = vor.u32 %v628, %v629
    %v631 = vshll.u32 2475754826, %v625
    %v632 = vshrl.u32 2131351028, %v626
    %v633 = vor.u32 %v631, %v632
    %v634 = vshll.u32 2131351028, %v625
    %v635 = vshrl.u32 2102212464, %v626
    %v636 = vor.u32 %v634, %v635
    %v637 = vshll.u32 2102212464, %v625
    %v638 = vshrl.u32 920167782, %v626
    %v639 = vor.u32 %v637, %v638
    %v640 = vshll.u32 920167782, %v625
    %v641 = vshrl.u32 1326507024, %v626
    %v642 = vor.u32 %v640, %v641
    %vm643 = vcmp.lt.s32.totalorder %v624, 1
    %vm644 = vcmp.lt.s32.totalorder %v624, 2
    %vm645 = vcmp.lt.s32.totalorder %v624, 3
    %vm646 = vcmp.lt.s32.totalorder %v624, 4
    %v647 = vsel %vm643, %v627, %v630
    %v648 = vsel %vm646, %v636, 2102212464
    %v649 = vsel %vm645, %v633, %v648
    %v650 = vsel %vm644, %v647, %v649
    %v651 = vsel %vm643, %v630, %v633
    %v652 = vsel %vm646, %v639, 920167782
    %v653 = vsel %vm645, %v636, %v652
    %v654 = vsel %vm644, %v651, %v653
    %v655 = vsel %vm643, %v633, %v636
    %v656 = vsel %vm646, %v642, 1326507024
    %v657 = vsel %vm645, %v639, %v656
    %v658 = vsel %vm644, %v655, %v657
    %v659 = vshll.u32 %v619, 8
    %v660 = vmul.u32.u64.compose %v659, %v658
    %v661 = vextract.low.u32 %v660
    %v662 = vextract.high.u32 %v660
    %v663 = vmul.u32.u64.compose %v659, %v654
    %v664 = vextract.low.u32 %v663
    %v665 = vextract.high.u32 %v663
    %v666 = vmul.u32 %v659, %v650
    %v667 = vadd.s32 %v662, %v664
    %vm668 = vc.u32 %v662, %v664
    %v669 = vadd.s32 %v665, 1
    %v670 = vsel %vm668, %v669, %v665
    %v671 = vadd.s32 %v666, %v670
    %v672 = vadd.s32 %v671, 536870912
    %v673 = vshrl.u32 %v672, 30
    %v674 = vshll.u32 %v673, 30
    %v675 = vsub.s32 %v671, %v674
    %vm676 = vcmp.lt.s32.totalorder %v675, 0
    %v677 = vsub.s32 0, %v675
    %v678 = vsel %vm676, %v677, %v675
    %v679 = vclz %v678
    %v680 = vsub.s32 %v679, 2
    %vm681 = vcmp.gt.s32.totalorder 0, %v680
    %v682 = vsel %vm681, 0, %v680
    %v683 = vsub.s32 32, %v682
    %v684 = vshll.u32 %v675, %v682
    %v685 = vshrl.u32 %v667, %v683
    %v686 = vor.u32 %v684, %v685
    %v687 = vsub.s32 4294967266, %v682
    %v688 = vadd.s32 %v687, 127
    %v689 = vshll.u32 %v688, 23
    %v690 = vor.u32 4788187, %v689
    %v691 = vand.u32 2147483647, %v690
    %v693 = vcvt.s32.f32 %v686
    %v694 = vmul.f32 %v693, %v691
    %v695 = vxor.u32 %v694, 2147483648
    %v696 = vsel %vm613, %v695, %v694
    %v697 = vsub.s32 4, %v673
    %v698 = vsel %vm613, %v697, %v673
    %v699 = vsel %vm612, %v610, %v696
    %v700 = vsel %vm612, 0, %v698
    %v701 = vcosq.f32.pop %v699
    %v702 = vsinq.f32.pop %v699
    %vm703 = vweird.f32 %v610
    %v704 = vand.u32 %v700, 3
    %vm705 = vcmp.lt.s32.totalorder %v704, 2
    %vm706 = vcmp.eq.s32.totalorder %v704, 0
    %v707 = vxor.u32 %v702, 2147483648
    %v708 = vsel %vm706, %v701, %v707
    %vm709 = vcmp.eq.s32.totalorder %v704, 2
    %v710 = vxor.u32 %v701, 2147483648
    %v711 = vsel %vm709, %v710, %v702
    %v712 = vsel %vm705, %v708, %v711
    %v713 = vsel %vm703, nan, %v712
    %v714 = vand.u32 2147483647, %v610
    %vm715 = vcmp.le.f32.partialorder %v714, 0.7853982
    %vm716 = vcmp.lt.s32.totalorder %v610, 0
    %v717 = vand.u32 %v610, 2139095040
    %v718 = vshrl.u32 %v717, 23
    %v719 = vsub.s32 %v718, 127
    %v720 = vand.u32 2147483647, %v610
    %v721 = vand.u32 %v720, 8388607
    %v722 = vor.u32 %v721, 8388608
    %v723 = vsub.s32 0, %v722
    %v724 = vadd.s32 %v719, 1
    %vm725 = vcmp.gt.s32.totalorder %v724, 0
    %v726 = vsel %vm725, %v724, 0
    %v727 = vshrl.u32 %v726, 5
    %v728 = vand.u32 %v726, 31
    %v729 = vsub.s32 32, %v728
    %v730 = vshrl.u32 683565275, %v729
    %v731 = vshll.u32 683565275, %v728
    %v732 = vshrl.u32 2475754826, %v729
    %v733 = vor.u32 %v731, %v732
    %v734 = vshll.u32 2475754826, %v728
    %v735 = vshrl.u32 2131351028, %v729
    %v736 = vor.u32 %v734, %v735
    %v737 = vshll.u32 2131351028, %v728
    %v738 = vshrl.u32 2102212464, %v729
    %v739 = vor.u32 %v737, %v738
    %v740 = vshll.u32 2102212464, %v728
    %v741 = vshrl.u32 920167782, %v729
    %v742 = vor.u32 %v740, %v741
    %v743 = vshll.u32 920167782, %v728
    %v744 = vshrl.u32 1326507024, %v729
    %v745 = vor.u32 %v743, %v744
    %vm746 = vcmp.lt.s32.totalorder %v727, 1
    %vm747 = vcmp.lt.s32.totalorder %v727, 2
    %vm748 = vcmp.lt.s32.totalorder %v727, 3
    %vm749 = vcmp.lt.s32.totalorder %v727, 4
    %v750 = vsel %vm746, %v730, %v733
    %v751 = vsel %vm749, %v739, 2102212464
    %v752 = vsel %vm748, %v736, %v751
    %v753 = vsel %vm747, %v750, %v752
    %v754 = vsel %vm746, %v733, %v736
    %v755 = vsel %vm749, %v742, 920167782
    %v756 = vsel %vm748, %v739, %v755
    %v757 = vsel %vm747, %v754, %v756
    %v758 = vsel %vm746, %v736, %v739
    %v759 = vsel %vm749, %v745, 1326507024
    %v760 = vsel %vm748, %v742, %v759
    %v761 = vsel %vm747, %v758, %v760
    %v762 = vshll.u32 %v722, 8
    %v763 = vmul.u32.u64.compose %v762, %v761
    %v764 = vextract.low.u32 %v763
    %v765 = vextract.high.u32 %v763
    %v766 = vmul.u32.u64.compose %v762, %v757
    %v767 = vextract.low.u32 %v766
    %v768 = vextract.high.u32 %v766
    %v769 = vmul.u32 %v762, %v753
    %v770 = vadd.s32 %v765, %v767
    %vm771 = vc.u32 %v765, %v767
    %v772 = vadd.s32 %v768, 1
    %v773 = vsel %vm771, %v772, %v768
    %v774 = vadd.s32 %v769, %v773
    %v775 = vadd.s32 %v774, 536870912
    %v776 = vshrl.u32 %v775, 30
    %v777 = vshll.u32 %v776, 30
    %v778 = vsub.s32 %v774, %v777
    %vm779 = vcmp.lt.s32.totalorder %v778, 0
    %v780 = vsub.s32 0, %v778
    %v781 = vsel %vm779, %v780, %v778
    %v782 = vclz %v781
    %v783 = vsub.s32 %v782, 2
    %vm784 = vcmp.gt.s32.totalorder 0, %v783
    %v785 = vsel %vm784, 0, %v783
    %v786 = vsub.s32 32, %v785
    %v787 = vshll.u32 %v778, %v785
    %v788 = vshrl.u32 %v770, %v786
    %v789 = vor.u32 %v787, %v788
    %v790 = vsub.s32 4294967266, %v785
    %v791 = vadd.s32 %v790, 127
    %v792 = vshll.u32 %v791, 23
    %v793 = vor.u32 4788187, %v792
    %v794 = vand.u32 2147483647, %v793
    %v796 = vcvt.s32.f32 %v789
    %v797 = vmul.f32 %v796, %v794
    %v798 = vxor.u32 %v797, 2147483648
    %v799 = vsel %vm716, %v798, %v797
    %v800 = vsub.s32 4, %v776
    %v801 = vsel %vm716, %v800, %v776
    %v802 = vsel %vm715, %v610, %v799
    %v803 = vsel %vm715, 0, %v801
    %v804 = vcosq.f32.pop %v802
    %v805 = vsinq.f32.pop %v802
    %vm806 = vweird.f32 %v610
    %v807 = vadd.s32 %v803, 3
    %v808 = vand.u32 %v807, 3
    %vm809 = vcmp.lt.s32.totalorder %v808, 2
    %vm810 = vcmp.eq.s32.totalorder %v808, 0
    %v811 = vxor.u32 %v805, 2147483648
    %v812 = vsel %vm810, %v804, %v811
    %vm813 = vcmp.eq.s32.totalorder %v808, 2
    %v814 = vxor.u32 %v804, 2147483648
    %v815 = vsel %vm813, %v814, %v805
    %v816 = vsel %vm809, %v812, %v815
    %v817 = vsel %vm806, nan, %v816
    %vm818 = vcmp.lt.f32.partialorder %v610, 0.01
    %v819 = vmul.f32 %v610, %v610
    %v820 = vmul.f32 %v819, 0.16666667
    %v821 = vsub.f32 1.0, %v820
    %v822 = vmax.f32 %v610, 1e-12
    %v823 = vrcp.pop %v822
    %v824 = vmul.f32 %v817, %v823
    %v825 = vsel %vm818, %v821, %v824
    %v826 = vmul.f32 %v713, %v463
    %v827 = vmul.f32 %v825, %v582
    %v828 = vadd.f32 %v826, %v827
    %v829 = vmul.f32 %v713, %v571
    %v831 = vrot.slane %v587, 6
    %v833 = vmul.f32 %v825, %v831
    %v834 = vadd.f32 %v829, %v833
    %v835 = vmul.f32 %v713, %v572
    %v837 = vrot.slane %v592, 7
    %v839 = vmul.f32 %v825, %v837
    %v840 = vadd.f32 %v835, %v839
    %v842 = vrot.slane %v350, 7
    %v845 = vrot.slane %v359, 6
    %v848 = vrot.slane %v828, 1
    %v851 = vrot.slane %v840, 7
    %vm853 = vcmask 1040384
    %v854 = vsel %vm853, %v344, %v842
    %vm855 = vcmask 1041408
    %v856 = vsel %vm855, %v854, %v845
    %vm857 = vcmask 1042432
    %v858 = vsel %vm857, %v856, %v360
    %vm859 = vcmask 1044480
    %v860 = vsel %vm859, %v858, %v848
    %vm861 = vcmask 1045504
    %v862 = vsel %vm861, %v860, %v834
    %vm863 = vcmask 1046528
    %v864 = vsel %vm863, %v862, %v851
    %v865 = vsel %vm853, 1.0, 0.0
    %v866 = vrot.slane %v282, 7
    %v869 = vrot.slane %v463, 1
    %v872 = vrot.slane %v572, 7
    %v874 = vsel %vm853, %v337, %v278
    %v875 = vsel %vm855, %v874, %v866
    %v876 = vsel %vm857, %v875, %v230
    %v877 = vsel %vm859, %v876, %v869
    %v878 = vsel %vm861, %v877, %v571
    %v879 = vsel %vm863, %v878, %v872
    %vm880 = vcmask 130048
    %v882 = vsel %vm880, %v48, 0
    %v885 = vsel %vm880, %v49, 0
    %v888 = vsel %vm880, %v50, 0
    %v891 = vsel %vm880, %v51, 0
    %v894 = vsel %vm880, %v52, 0
    %896 = vmatprep.subr.mxu0 0.0
    %897 = vmatpush1.msra.mxu0 %v864
    %898 = vmatprep.subr.mxu0 0.0
    %899 = vmatpush1.msra.mxu0 %v865
    %900 = vmatprep.subr.mxu0 0.0
    %901 = vmatpush1.msra.mxu0 0.0
    %902 = vmatprep.subr.mxu0 0.0
    %903 = vmatpush1.msra.mxu0 0.0
    %904 = vmatprep.subr.mxu0 0.0
    %905 = vmatpush1.msra.mxu0 0.0
    %906 = vmatprep.subr.mxu0 0.0
    %907 = vmatpush1.msra.mxu0 0.0
    %908 = vmatprep.subr.mxu0 0.0
    %909 = vmatpush1.msra.mxu0 0.0
    %910 = vmatprep.subr.mxu0 0.0
    %911 = vmatpush1.msra.mxu0 0.0
    %912 = vmatprep.subr.mxu0 0.0
    %913 = vmatpush1.msra.mxu0 0.0
    %914 = vmatprep.subr.mxu0 0.0
    %915 = vmatpush1.msra.mxu0 0.0
    %916 = vmatprep.subr.mxu0 0.0
    %917 = vmatpush1.msra.mxu0 0.0
    %918 = vmatprep.subr.mxu0 0.0
    %919 = vmatpush1.msra.mxu0 0.0
    %920 = vmatprep.subr.mxu0 0.0
    %921 = vmatpush1.msra.mxu0 0.0
    %922 = vmatprep.subr.mxu0 0.0
    %923 = vmatpush1.msra.mxu0 0.0
    %924 = vmatprep.subr.mxu0 0.0
    %925 = vmatpush1.msra.mxu0 0.0
    %926 = vmatprep.subr.mxu0 0.0
    %927 = vmatpush1.msra.mxu0 0.0
    %928 = vmatprep.subr.mxu0 0.0
    %929 = vmatpush1.msra.mxu0 0.0
    %930 = vmatprep.subr.mxu0 0.0
    %931 = vmatpush1.msra.mxu0 0.0
    %932 = vmatprep.subr.mxu0 0.0
    %933 = vmatpush1.msra.mxu0 0.0
    %934 = vmatprep.subr.mxu0 0.0
    %935 = vmatpush1.msra.mxu0 0.0
    %936 = vmatprep.subr.mxu0 0.0
    %937 = vmatpush1.msra.mxu0 0.0
    %938 = vmatprep.subr.mxu0 0.0
    %939 = vmatpush1.msra.mxu0 0.0
    %940 = vmatprep.subr.mxu0 0.0
    %941 = vmatpush1.msra.mxu0 0.0
    %942 = vmatprep.subr.mxu0 0.0
    %943 = vmatpush1.msra.mxu0 0.0
    %944 = vmatprep.subr.mxu0 0.0
    %945 = vmatpush1.msra.mxu0 0.0
    %946 = vmatprep.subr.mxu0 0.0
    %947 = vmatpush1.msra.mxu0 0.0
    %948 = vmatprep.subr.mxu0 0.0
    %949 = vmatpush1.msra.mxu0 0.0
    %950 = vmatprep.subr.mxu0 0.0
    %951 = vmatpush1.msra.mxu0 0.0
    %952 = vmatprep.subr.mxu0 0.0
    %953 = vmatpush1.msra.mxu0 0.0
    %954 = vmatprep.subr.mxu0 0.0
    %955 = vmatpush1.msra.mxu0 0.0
    %956 = vmatprep.subr.mxu0 0.0
    %957 = vmatpush1.msra.mxu0 0.0
    %958 = vmatprep.subr.mxu0 0.0
    %959 = vmatpush1.msra.mxu0 0.0
    %960 = vmatprep.mubr.f32.mxu0 0.0
    %961 = vmatmul.mubr.f32.gmra.mrb[0].mxu0 %v882
    %v962 = vpop.f32.mrb[0].mxu0
    %v963 = vadd.f32 0.0, %v962
    %v964 = vpop.f32.mrb[0].mxu0
    %965 = vmatprep.mubr.f32.mxu0 0.0
    %966 = vmatmul.mubr.f32.gmra.mrb[0].mxu0 %v885
    %v967 = vpop.f32.mrb[0].mxu0
    %v968 = vadd.f32 0.0, %v967
    %v969 = vpop.f32.mrb[0].mxu0
    %970 = vmatprep.mubr.f32.mxu0 0.0
    %971 = vmatmul.mubr.f32.gmra.mrb[0].mxu0 %v888
    %v972 = vpop.f32.mrb[0].mxu0
    %v973 = vadd.f32 0.0, %v972
    %v974 = vpop.f32.mrb[0].mxu0
    %975 = vmatprep.mubr.f32.mxu0 0.0
    %976 = vmatmul.mubr.f32.gmra.mrb[0].mxu0 %v891
    %v977 = vpop.f32.mrb[0].mxu0
    %v978 = vadd.f32 0.0, %v977
    %v979 = vpop.f32.mrb[0].mxu0
    %980 = vmatprep.mubr.f32.mxu0 0.0
    %981 = vmatmul.mubr.f32.gmra.mrb[0].mxu0 %v894
    %v982 = vpop.f32.mrb[0].mxu0
    %v983 = vadd.f32 0.0, %v982
    %v984 = vpop.f32.mrb[0].mxu0
    %985 = vdwg.mxu0
    %v986 = vmax.f32 %v963, 0.0
    %v987 = vmax.f32 %v968, 0.0
    %v988 = vmax.f32 %v973, 0.0
    %v989 = vmax.f32 %v978, 0.0
    %v990 = vmax.f32 %v983, 0.0
    %v992 = vsel %vm156, %v53, 0
    %v995 = vsel %vm156, %v54, 0
    %v998 = vsel %vm156, %v55, 0
    %v1001 = vsel %vm156, %v56, 0
    %v1004 = vsel %vm156, %v57, 0
    %v1007 = vsel %vm156, %v58, 0
    %v1010 = vsel %vm156, %v59, 0
    %v1013 = vsel %vm156, %v60, 0
    %1015 = vmatprep.subr.mxu0 0.0
    %1016 = vmatpush1.msra.mxu0 %v986
    %1017 = vmatprep.subr.mxu0 0.0
    %1018 = vmatpush1.msra.mxu0 %v987
    %1019 = vmatprep.subr.mxu0 0.0
    %1020 = vmatpush1.msra.mxu0 %v988
    %1021 = vmatprep.subr.mxu0 0.0
    %1022 = vmatpush1.msra.mxu0 %v989
    %1023 = vmatprep.subr.mxu0 0.0
    %1024 = vmatpush1.msra.mxu0 %v990
    %1025 = vmatprep.subr.mxu0 0.0
    %1026 = vmatpush1.msra.mxu0 0.0
    %1027 = vmatprep.subr.mxu0 0.0
    %1028 = vmatpush1.msra.mxu0 0.0
    %1029 = vmatprep.subr.mxu0 0.0
    %1030 = vmatpush1.msra.mxu0 0.0
    %1031 = vmatprep.subr.mxu0 0.0
    %1032 = vmatpush1.msra.mxu0 0.0
    %1033 = vmatprep.subr.mxu0 0.0
    %1034 = vmatpush1.msra.mxu0 0.0
    %1035 = vmatprep.subr.mxu0 0.0
    %1036 = vmatpush1.msra.mxu0 0.0
    %1037 = vmatprep.subr.mxu0 0.0
    %1038 = vmatpush1.msra.mxu0 0.0
    %1039 = vmatprep.subr.mxu0 0.0
    %1040 = vmatpush1.msra.mxu0 0.0
    %1041 = vmatprep.subr.mxu0 0.0
    %1042 = vmatpush1.msra.mxu0 0.0
    %1043 = vmatprep.subr.mxu0 0.0
    %1044 = vmatpush1.msra.mxu0 0.0
    %1045 = vmatprep.subr.mxu0 0.0
    %1046 = vmatpush1.msra.mxu0 0.0
    %1047 = vmatprep.subr.mxu0 0.0
    %1048 = vmatpush1.msra.mxu0 0.0
    %1049 = vmatprep.subr.mxu0 0.0
    %1050 = vmatpush1.msra.mxu0 0.0
    %1051 = vmatprep.subr.mxu0 0.0
    %1052 = vmatpush1.msra.mxu0 0.0
    %1053 = vmatprep.subr.mxu0 0.0
    %1054 = vmatpush1.msra.mxu0 0.0
    %1055 = vmatprep.subr.mxu0 0.0
    %1056 = vmatpush1.msra.mxu0 0.0
    %1057 = vmatprep.subr.mxu0 0.0
    %1058 = vmatpush1.msra.mxu0 0.0
    %1059 = vmatprep.subr.mxu0 0.0
    %1060 = vmatpush1.msra.mxu0 0.0
    %1061 = vmatprep.subr.mxu0 0.0
    %1062 = vmatpush1.msra.mxu0 0.0
    %1063 = vmatprep.subr.mxu0 0.0
    %1064 = vmatpush1.msra.mxu0 0.0
    %1065 = vmatprep.subr.mxu0 0.0
    %1066 = vmatpush1.msra.mxu0 0.0
    %1067 = vmatprep.subr.mxu0 0.0
    %1068 = vmatpush1.msra.mxu0 0.0
    %1069 = vmatprep.subr.mxu0 0.0
    %1070 = vmatpush1.msra.mxu0 0.0
    %1071 = vmatprep.subr.mxu0 0.0
    %1072 = vmatpush1.msra.mxu0 0.0
    %1073 = vmatprep.subr.mxu0 0.0
    %1074 = vmatpush1.msra.mxu0 0.0
    %1075 = vmatprep.subr.mxu0 0.0
    %1076 = vmatpush1.msra.mxu0 0.0
    %1077 = vmatprep.subr.mxu0 0.0
    %1078 = vmatpush1.msra.mxu0 0.0
    %1079 = vmatprep.mubr.f32.mxu0 0.0
    %1080 = vmatmul.mubr.f32.gmra.mrb[0].mxu0 %v992
    %v1081 = vpop.f32.mrb[0].mxu0
    %v1082 = vadd.f32 0.0, %v1081
    %v1083 = vpop.f32.mrb[0].mxu0
    %1084 = vmatprep.mubr.f32.mxu0 0.0
    %1085 = vmatmul.mubr.f32.gmra.mrb[0].mxu0 %v995
    %v1086 = vpop.f32.mrb[0].mxu0
    %v1087 = vadd.f32 0.0, %v1086
    %v1088 = vpop.f32.mrb[0].mxu0
    %1089 = vmatprep.mubr.f32.mxu0 0.0
    %1090 = vmatmul.mubr.f32.gmra.mrb[0].mxu0 %v998
    %v1091 = vpop.f32.mrb[0].mxu0
    %v1092 = vadd.f32 0.0, %v1091
    %v1093 = vpop.f32.mrb[0].mxu0
    %1094 = vmatprep.mubr.f32.mxu0 0.0
    %1095 = vmatmul.mubr.f32.gmra.mrb[0].mxu0 %v1001
    %v1096 = vpop.f32.mrb[0].mxu0
    %v1097 = vadd.f32 0.0, %v1096
    %v1098 = vpop.f32.mrb[0].mxu0
    %1099 = vmatprep.mubr.f32.mxu0 0.0
    %1100 = vmatmul.mubr.f32.gmra.mrb[0].mxu0 %v1004
    %v1101 = vpop.f32.mrb[0].mxu0
    %v1102 = vadd.f32 0.0, %v1101
    %v1103 = vpop.f32.mrb[0].mxu0
    %1104 = vmatprep.mubr.f32.mxu0 0.0
    %1105 = vmatmul.mubr.f32.gmra.mrb[0].mxu0 %v1007
    %v1106 = vpop.f32.mrb[0].mxu0
    %v1107 = vadd.f32 0.0, %v1106
    %v1108 = vpop.f32.mrb[0].mxu0
    %1109 = vmatprep.mubr.f32.mxu0 0.0
    %1110 = vmatmul.mubr.f32.gmra.mrb[0].mxu0 %v1010
    %v1111 = vpop.f32.mrb[0].mxu0
    %v1112 = vadd.f32 0.0, %v1111
    %v1113 = vpop.f32.mrb[0].mxu0
    %1114 = vmatprep.mubr.f32.mxu0 0.0
    %1115 = vmatmul.mubr.f32.gmra.mrb[0].mxu0 %v1013
    %v1116 = vpop.f32.mrb[0].mxu0
    %v1117 = vadd.f32 0.0, %v1116
    %v1118 = vpop.f32.mrb[0].mxu0
    %1119 = vdwg.mxu0
    %vm1120 = vcmask 64512
    %1121 = vst.msk [vmem:[%s2] sm:$0xff] %vm1120, %v1082
    %1122 = vst.msk [vmem:[%s2 + $0x8] sm:$0xff] %vm1120, %v1087
    %1123 = vst.msk [vmem:[%s2 + $0x10] sm:$0xff] %vm1120, %v1092
    %1124 = vst.msk [vmem:[%s2 + $0x18] sm:$0xff] %vm1120, %v1097
    %1125 = vst.msk [vmem:[%s2 + $0x20] sm:$0xff] %vm1120, %v1102
    %1126 = vst.msk [vmem:[%s2 + $0x28] sm:$0xff] %vm1120, %v1107
    %1127 = vst.msk [vmem:[%s2 + $0x30] sm:$0xff] %vm1120, %v1112
    %1128 = vst.msk [vmem:[%s2 + $0x38] sm:$0xff] %vm1120, %v1117
    %1129 = vst.msk [vmem:[%s2 + $0x40] sm:$0xff] %vm1120, %v879
    %v1130 = vsel %vm861, %v240, 0.0
    %1131 = vst.msk [vmem:[%s2 + $0x48] sm:$0xff] %vm1120, %v1130
    // Predicated region
    $region14: #{tpu_custom_call.1} parent=1 // pred_check
      _
    $region15: #{tpu_custom_call.1} parent=1 // pred_check_branch
      %1133 = sbr.rel (0) target = $region17
    $region16: #{tpu_custom_call.1} parent=1 // pred_region
      _
    $region17: #{tpu_custom_call.1} parent=1 // pred_fallthru
      _
    // Predicated region
    $region18: #{tpu_custom_call.1} parent=1 // pred_check
      _
    $region19: #{tpu_custom_call.1} parent=1 // pred_check_branch
      %1135 = sbr.rel (0) target = $region21
    $region20: #{tpu_custom_call.1} parent=1 // pred_region
      _
    $region21: #{tpu_custom_call.1} parent=1 // pred_fallthru
      _
    %1136 = vsyncpa [#allocation3], 1

</llo_original>
